<compile_context>
chip_gen: v7x
topology: tpu7x:2x2x1
jax: 0.10.0
libtpu: 0.0.40
codegen_flags: <defaults>
</compile_context>

<pallas_src>
import functools

import jax
import jax.numpy as jnp
from jax.experimental import pallas as pl
from jax.experimental.pallas import tpu as pltpu


# ----------------------------------------------------------------------------
# Fused kernel factory.  All sizes / layer count / last_only / bf16 are static.
#
# Kernel ref order:
#   x_ref                         (T, B, D)   time-major input
#   layer 0 (3 refs):
#     wx0  (D, 4H)   [W_ir | W_iz | W_in | 0]          (bf16 if use_bf16)
#     wh0  (H, 4H)   [W_hr | W_hz | 0    | W_hn]       (bf16 if use_bf16)
#     b0   (1, 4H)   [b_ir+b_hr | b_iz+b_hz | b_in | b_hn]   (f32)
#   layers 1..n-1 (2 refs each):
#     wbig (2H, 4H)  rows 0..H  = [W_ir | W_iz | W_in | 0]
#                    rows H..2H = [W_hr | W_hz | 0    | W_hn]  (bf16 if use_bf16)
#     brow (1, 4H)   [b_ir+b_hr | b_iz+b_hz | b_in | b_hn]     (f32)
#   fw1 (F_fc_in, F_mid), fb1 (1, F_mid), fw2 (F_mid, F_out), fb2 (1, F_out)
#   out_ref                       (B, F_out)
# ----------------------------------------------------------------------------
def make_fused_kernel(n_rnn, B, T, H, last_only, use_bf16):
    H4 = 4 * H

    def mxu(a, w):
        # Weights already cast in the wrapper; cast only the activation operand here.
        if use_bf16:
            a = a.astype(jnp.bfloat16)
        return jnp.dot(a, w, preferred_element_type=jnp.float32)

    def gru_gates(g, h_prev):
        # g: (B, 4H) pre-activations packed [r | z | n_in | n_h(+b_hn)].
        rz = jax.nn.sigmoid(g[:, :2 * H])            # merged sigmoid: one EUP call
        r, z = rz[:, :H], rz[:, H:]
        n = jnp.tanh(g[:, 2 * H:3 * H] + r * g[:, 3 * H:])
        if h_prev is None:                           # h_{-1} == 0
            return (1.0 - z) * n
        return (1.0 - z) * n + z * h_prev            # PyTorch GRU update

    def kernel(*refs):
        x_ref = refs[0]
        out_ref = refs[-1]
        prefs = refs[1:-1]
        fw1_ref, fb1_ref, fw2_ref, fb2_ref = prefs[-4:]
        rnn_refs = prefs[:-4]

        D = x_ref.shape[2]

        # ---- Layer 0: hoisted input projection for ALL timesteps (off-chain). ----
        wx0 = rnn_refs[0][...]
        wh0 = rnn_refs[1][...]
        b0 = rnn_refs[2][...]
        x2d = x_ref[...].reshape(T * B, D)                     # layout-preserving
        gi0 = mxu(x2d, wx0) + b0                               # (T*B, 4H), biases folded

        # ---- Hoisted weight loads / bias broadcasts for layers >= 1. ----
        wbigs, brows = [], []
        for li in range(1, n_rnn):
            wbigs.append(rnn_refs[3 + 2 * (li - 1)][...])          # (2H, 4H)
            brows.append(jnp.broadcast_to(rnn_refs[4 + 2 * (li - 1)][...], (B, H4)))

        hs = [None] * n_rnn        # per-layer hidden state; None == all-zero (t == 0)
        outs = []                  # top-layer outputs (Flatten path only)

        # Wavefront: one fully-unrolled time loop; layer li at step t consumes
        # layer li-1's hidden of the same step.  Dataflow lets the LLO scheduler
        # overlap layer-0 step t+1 with layer-1 step t.
        for t in range(T):
            # layer 0: one recurrent matmul per step (input part pre-computed).
            g0 = gi0[t * B:(t + 1) * B, :]                     # contiguous row block
            if hs[0] is not None:
                g0 = g0 + mxu(hs[0], wh0)
            hs[0] = gru_gates(g0, hs[0])
            below = hs[0]

            # layers >= 1: ONE fused dot per step over [h_below_t | h_prev].
            for li in range(1, n_rnn):
                if hs[li] is None:
                    g = mxu(below, wbigs[li - 1][:H, :]) + brows[li - 1]
                else:
                    a = jnp.concatenate([below, hs[li]], axis=1)     # (B, 2H)
                    g = mxu(a, wbigs[li - 1]) + brows[li - 1]
                hs[li] = gru_gates(g, hs[li])
                below = hs[li]

            if not last_only:
                outs.append(hs[n_rnn - 1])

        if last_only:
            feat = hs[n_rnn - 1]                               # res[:, -1, :]
        else:
            # PyTorch Flatten of (B, T, H): column block t holds h_t.
            feat = jnp.concatenate(outs, axis=1)               # (B, T*H)

        # Fused FC head: Linear -> ReLU -> Linear (tail, off the recurrence chain).
        hmid = jnp.dot(feat, fw1_ref[...], preferred_element_type=jnp.float32) + fb1_ref[...]
        hmid = jnp.maximum(hmid, 0.0)
        out_ref[...] = (jnp.dot(hmid, fw2_ref[...], preferred_element_type=jnp.float32)
                        + fb2_ref[...]).astype(out_ref.dtype)

    return kernel


# ----------------------------------------------------------------------------
# Wrapper: packs per-gate GRU weights (gate order r, z, n like PyTorch) into the
# 4H layout [r | z | n_in | n_h], folds biases, and launches one fused pallas_call.
#
# NOTE: real PyTorch checkpoints store weight_ih_l*/weight_hh_l* as (3H, in)/(3H, H);
# transpose each gate block before this packing.  The synthetic init below already
# generates (3, in, H) / (3, H, H).
# ----------------------------------------------------------------------------
def _pack_layer0(layer):
    wih, whh, bih, bhh = layer["wih"], layer["whh"], layer["bih"], layer["bhh"]
    wx = jnp.concatenate([wih[0], wih[1], wih[2], jnp.zeros_like(wih[2])], axis=1)  # (D, 4H)
    wh = jnp.concatenate([whh[0], whh[1], jnp.zeros_like(whh[2]), whh[2]], axis=1)  # (H, 4H)
    b = jnp.concatenate([bih[0] + bhh[0], bih[1] + bhh[1], bih[2], bhh[2]], axis=1)  # (1, 4H)
    return wx, wh, b


def _pack_layer_fused(layer):
    # Layers >= 1 (input size == H): stacked [W_ih ; W_hh] for the per-step fused dot.
    wih, whh, bih, bhh = layer["wih"], layer["whh"], layer["bih"], layer["bhh"]
    top = jnp.concatenate([wih[0], wih[1], wih[2], jnp.zeros_like(wih[2])], axis=1)  # (H, 4H)
    bot = jnp.concatenate([whh[0], whh[1], jnp.zeros_like(whh[2]), whh[2]], axis=1)  # (H, 4H)
    wbig = jnp.concatenate([top, bot], axis=0)                                       # (2H, 4H)
    brow = jnp.concatenate([bih[0] + bhh[0], bih[1] + bhh[1], bih[2], bhh[2]], axis=1)
    return wbig, brow


def earth_systems_rnn_forward(x_btd, params, last_only=True, use_bf16_matmul=True):
    """x_btd: (B, T, D) batch-first, like PyTorch GRU(batch_first=True)."""
    B, T, D = x_btd.shape
    H = params["rnn"][0]["whh"].shape[-1]
    n_rnn = len(params["rnn"])
    fc = params["fc"]
    fc_in = H if last_only else T * H
    assert fc["w1"].shape[0] == fc_in, (fc["w1"].shape, fc_in)

    # Time-major presentation (pure layout plumbing on a tiny array): per-step slices
    # of the hoisted layer-0 projection become contiguous row blocks in the kernel.
    x_tbd = jnp.transpose(x_btd, (1, 0, 2))

    wdt = jnp.bfloat16 if use_bf16_matmul else jnp.float32
    inputs = [x_tbd]
    wx0, wh0, b0 = _pack_layer0(params["rnn"][0])
    inputs += [wx0.astype(wdt), wh0.astype(wdt), b0]
    for layer in params["rnn"][1:]:
        wbig, brow = _pack_layer_fused(layer)
        inputs += [wbig.astype(wdt), brow]
    inputs += [fc["w1"], fc["b1"], fc["w2"], fc["b2"]]

    F_out = fc["w2"].shape[-1]
    kernel = make_fused_kernel(n_rnn, B, T, H, last_only, use_bf16_matmul)
    vmem = pl.BlockSpec(memory_space=pltpu.MemorySpace.VMEM)
    return pl.pallas_call(
        kernel,
        out_shape=jax.ShapeDtypeStruct((B, F_out), jnp.float32),
        in_specs=[vmem] * len(inputs),
        out_specs=vmem,
    )(*inputs)


# ----------------------------------------------------------------------------
# Deterministic parameter init (PyTorch-style uniform(-1/sqrt(H), 1/sqrt(H))).
# ----------------------------------------------------------------------------
def init_params(key, d_in, hidden, n_rnn_layers, fc_in, fc_mid, fc_out):
    def uniform(k, shape, bound):
        return jax.random.uniform(k, shape, jnp.float32, -bound, bound)

    params = {"rnn": []}
    bound = 1.0 / jnp.sqrt(jnp.float32(hidden))
    layer_in = d_in
    for _ in range(n_rnn_layers):
        key, k1, k2, k3, k4 = jax.random.split(key, 5)
        params["rnn"].append({
            "wih": uniform(k1, (3, layer_in, hidden), bound),
            "whh": uniform(k2, (3, hidden, hidden), bound),
            "bih": uniform(k3, (3, 1, hidden), bound),
            "bhh": uniform(k4, (3, 1, hidden), bound),
        })
        layer_in = hidden

    key, k1, k2, k3, k4 = jax.random.split(key, 5)
    b1 = 1.0 / jnp.sqrt(jnp.float32(fc_in))
    b2 = 1.0 / jnp.sqrt(jnp.float32(fc_mid))
    params["fc"] = {
        "w1": uniform(k1, (fc_in, fc_mid), b1),
        "b1": uniform(k2, (1, fc_mid), b1),
        "w2": uniform(k3, (fc_mid, fc_out), b2),
        "b2": uniform(k4, (1, fc_out), b2),
    }
    return params


# Pure-JAX reference (mirrors the PyTorch module) for a numerics sanity check.
def reference_forward(x_btd, params, last_only=True):
    res = x_btd
    for layer in params["rnn"]:
        wih, whh, bih, bhh = layer["wih"], layer["whh"], layer["bih"], layer["bhh"]
        Bb, Tt, _ = res.shape
        Hh = whh.shape[-1]
        h = jnp.zeros((Bb, Hh), jnp.float32)
        outs = []
        for t in range(Tt):
            xt = res[:, t, :]
            r = jax.nn.sigmoid(xt @ wih[0] + bih[0] + h @ whh[0] + bhh[0])
            z = jax.nn.sigmoid(xt @ wih[1] + bih[1] + h @ whh[1] + bhh[1])
            n = jnp.tanh(xt @ wih[2] + bih[2] + r * (h @ whh[2] + bhh[2]))
            h = (1.0 - z) * n + z * h
            outs.append(h)
        res = jnp.stack(outs, axis=1)
    feat = res[:, -1, :] if last_only else res.reshape(res.shape[0], -1)
    fc = params["fc"]
    hmid = jnp.maximum(feat @ fc["w1"] + fc["b1"], 0.0)
    return hmid @ fc["w2"] + fc["b2"]


if __name__ == "__main__":
    # Batch 8 (per review): fills all 8 sublanes / MXU rows; still a tiny problem.
    B, T, D_IN, HIDDEN = 8, 8, 4, 32
    FC_MID, FC_OUT = 16, 1
    LAST_ONLY = True

    key = jax.random.PRNGKey(0)
    key, kx = jax.random.split(key)
    x = jax.random.normal(kx, (B, T, D_IN), jnp.float32)   # (batch, seq, features)

    fc_in = HIDDEN if LAST_ONLY else T * HIDDEN
    params = init_params(key, D_IN, HIDDEN, n_rnn_layers=2,
                         fc_in=fc_in, fc_mid=FC_MID, fc_out=FC_OUT)

    # f32-operand path: numerics-comparable with the PyTorch-style reference.
    fwd_f32 = jax.jit(functools.partial(earth_systems_rnn_forward,
                                        last_only=LAST_ONLY, use_bf16_matmul=False))
    out_f32 = jax.block_until_ready(fwd_f32(x, params))
    with jax.default_matmul_precision("highest"):
        ref = jax.block_until_ready(reference_forward(x, params, last_only=LAST_ONLY))
    assert out_f32.shape == (B, FC_OUT), out_f32.shape
    assert jnp.allclose(out_f32, ref, atol=3e-3, rtol=3e-3), \
        float(jnp.max(jnp.abs(out_f32 - ref)))

    # Performance path: bf16 MXU operands (flag-gated; state/gates stay f32).
    fwd = jax.jit(functools.partial(earth_systems_rnn_forward,
                                    last_only=LAST_ONLY, use_bf16_matmul=True))
    out = jax.block_until_ready(fwd(x, params))
    assert out.shape == (B, FC_OUT), out.shape
    print("KERNEL_OK")
</pallas_src>

<mosaic_0001>
module attributes {stable_mosaic.version = 11 : i64} {
  func.func @kernel(%arg0: memref<8x8x4xf32, #tpu.memory_space<vmem>>, %arg1: memref<4x128xf32, #tpu.memory_space<vmem>>, %arg2: memref<32x128xf32, #tpu.memory_space<vmem>>, %arg3: memref<1x128xf32, #tpu.memory_space<vmem>>, %arg4: memref<64x128xf32, #tpu.memory_space<vmem>>, %arg5: memref<1x128xf32, #tpu.memory_space<vmem>>, %arg6: memref<32x16xf32, #tpu.memory_space<vmem>>, %arg7: memref<1x16xf32, #tpu.memory_space<vmem>>, %arg8: memref<16x1xf32, #tpu.memory_space<vmem>>, %arg9: memref<1x1xf32, #tpu.memory_space<vmem>>, %arg10: memref<8x1xf32, #tpu.memory_space<vmem>>) attributes {dimension_semantics = [], scalar_prefetch = 0 : i64, scratch_operands = 0 : i64, tpu.core_type = #tpu.core_type<tc>} {
    %c0 = arith.constant 0 : index
    %c0_0 = arith.constant 0 : index
    %0 = vector.load %arg1[%c0, %c0_0] : memref<4x128xf32, #tpu.memory_space<vmem>>, vector<4x128xf32>
    %c0_1 = arith.constant 0 : index
    %c0_2 = arith.constant 0 : index
    %1 = vector.load %arg2[%c0_1, %c0_2] : memref<32x128xf32, #tpu.memory_space<vmem>>, vector<32x128xf32>
    %c0_3 = arith.constant 0 : index
    %c0_4 = arith.constant 0 : index
    %2 = vector.load %arg3[%c0_3, %c0_4] : memref<1x128xf32, #tpu.memory_space<vmem>>, vector<1x128xf32>
    %c0_5 = arith.constant 0 : index
    %c0_6 = arith.constant 0 : index
    %c0_7 = arith.constant 0 : index
    %3 = vector.load %arg0[%c0_5, %c0_6, %c0_7] : memref<8x8x4xf32, #tpu.memory_space<vmem>>, vector<8x8x4xf32>
    %4 = vector.shape_cast %3 : vector<8x8x4xf32> to vector<64x4xf32>
    %cst = arith.constant dense<0.000000e+00> : vector<64x128xf32>
    %5 = tpu.matmul %4, %0, %cst {dimension_numbers = #tpu.dot_dimension_numbers<[1], [0], [0], [1], [0, 0, 1, 1], [], []>} : vector<64x4xf32>, vector<4x128xf32>, vector<64x128xf32> -> vector<64x128xf32>
    %6 = vector.broadcast %2 : vector<1x128xf32> to vector<64x128xf32>
    %7 = arith.addf %5, %6 : vector<64x128xf32>
    %c0_8 = arith.constant 0 : index
    %c0_9 = arith.constant 0 : index
    %8 = vector.load %arg4[%c0_8, %c0_9] : memref<64x128xf32, #tpu.memory_space<vmem>>, vector<64x128xf32>
    %c0_10 = arith.constant 0 : index
    %c0_11 = arith.constant 0 : index
    %9 = vector.load %arg5[%c0_10, %c0_11] : memref<1x128xf32, #tpu.memory_space<vmem>>, vector<1x128xf32>
    %10 = vector.shape_cast %9 : vector<1x128xf32> to vector<1x128xf32>
    %11 = vector.broadcast %10 : vector<1x128xf32> to vector<8x128xf32>
    %12 = vector.extract_strided_slice %7 {offsets = [0, 0], sizes = [8, 128], strides = [1, 1]} : vector<64x128xf32> to vector<8x128xf32>
    %13 = vector.extract_strided_slice %12 {offsets = [0, 0], sizes = [8, 64], strides = [1, 1]} : vector<8x128xf32> to vector<8x64xf32>
    %14 = arith.negf %13 : vector<8x64xf32>
    %15 = math.exp %14 : vector<8x64xf32>
    %cst_12 = arith.constant 1.000000e+00 : f32
    %16 = vector.broadcast %cst_12 : f32 to vector<8x64xf32>
    %17 = arith.addf %16, %15 : vector<8x64xf32>
    %18 = arith.divf %16, %17 : vector<8x64xf32>
    %19 = vector.extract_strided_slice %18 {offsets = [0, 0], sizes = [8, 32], strides = [1, 1]} : vector<8x64xf32> to vector<8x32xf32>
    %20 = vector.extract_strided_slice %18 {offsets = [0, 32], sizes = [8, 32], strides = [1, 1]} : vector<8x64xf32> to vector<8x32xf32>
    %21 = vector.extract_strided_slice %12 {offsets = [0, 64], sizes = [8, 32], strides = [1, 1]} : vector<8x128xf32> to vector<8x32xf32>
    %22 = vector.extract_strided_slice %12 {offsets = [0, 96], sizes = [8, 32], strides = [1, 1]} : vector<8x128xf32> to vector<8x32xf32>
    %23 = arith.mulf %19, %22 : vector<8x32xf32>
    %24 = arith.addf %21, %23 : vector<8x32xf32>
    %25 = math.tanh %24 : vector<8x32xf32>
    %cst_13 = arith.constant 1.000000e+00 : f32
    %26 = vector.broadcast %cst_13 : f32 to vector<8x32xf32>
    %27 = arith.subf %26, %20 : vector<8x32xf32>
    %28 = arith.mulf %27, %25 : vector<8x32xf32>
    %29 = vector.extract_strided_slice %8 {offsets = [0, 0], sizes = [32, 128], strides = [1, 1]} : vector<64x128xf32> to vector<32x128xf32>
    %cst_14 = arith.constant dense<0.000000e+00> : vector<8x128xf32>
    %30 = tpu.matmul %28, %29, %cst_14 {dimension_numbers = #tpu.dot_dimension_numbers<[1], [0], [0], [1], [0, 0, 1, 1], [], []>} : vector<8x32xf32>, vector<32x128xf32>, vector<8x128xf32> -> vector<8x128xf32>
    %31 = arith.addf %30, %11 : vector<8x128xf32>
    %32 = vector.extract_strided_slice %31 {offsets = [0, 0], sizes = [8, 64], strides = [1, 1]} : vector<8x128xf32> to vector<8x64xf32>
    %33 = arith.negf %32 : vector<8x64xf32>
    %34 = math.exp %33 : vector<8x64xf32>
    %cst_15 = arith.constant 1.000000e+00 : f32
    %35 = vector.broadcast %cst_15 : f32 to vector<8x64xf32>
    %36 = arith.addf %35, %34 : vector<8x64xf32>
    %37 = arith.divf %35, %36 : vector<8x64xf32>
    %38 = vector.extract_strided_slice %37 {offsets = [0, 0], sizes = [8, 32], strides = [1, 1]} : vector<8x64xf32> to vector<8x32xf32>
    %39 = vector.extract_strided_slice %37 {offsets = [0, 32], sizes = [8, 32], strides = [1, 1]} : vector<8x64xf32> to vector<8x32xf32>
    %40 = vector.extract_strided_slice %31 {offsets = [0, 64], sizes = [8, 32], strides = [1, 1]} : vector<8x128xf32> to vector<8x32xf32>
    %41 = vector.extract_strided_slice %31 {offsets = [0, 96], sizes = [8, 32], strides = [1, 1]} : vector<8x128xf32> to vector<8x32xf32>
    %42 = arith.mulf %38, %41 : vector<8x32xf32>
    %43 = arith.addf %40, %42 : vector<8x32xf32>
    %44 = math.tanh %43 : vector<8x32xf32>
    %cst_16 = arith.constant 1.000000e+00 : f32
    %45 = vector.broadcast %cst_16 : f32 to vector<8x32xf32>
    %46 = arith.subf %45, %39 : vector<8x32xf32>
    %47 = arith.mulf %46, %44 : vector<8x32xf32>
    %48 = vector.extract_strided_slice %7 {offsets = [8, 0], sizes = [8, 128], strides = [1, 1]} : vector<64x128xf32> to vector<8x128xf32>
    %cst_17 = arith.constant dense<0.000000e+00> : vector<8x128xf32>
    %49 = tpu.matmul %28, %1, %cst_17 {dimension_numbers = #tpu.dot_dimension_numbers<[1], [0], [0], [1], [0, 0, 1, 1], [], []>} : vector<8x32xf32>, vector<32x128xf32>, vector<8x128xf32> -> vector<8x128xf32>
    %50 = arith.addf %48, %49 : vector<8x128xf32>
    %51 = vector.extract_strided_slice %50 {offsets = [0, 0], sizes = [8, 64], strides = [1, 1]} : vector<8x128xf32> to vector<8x64xf32>
    %52 = arith.negf %51 : vector<8x64xf32>
    %53 = math.exp %52 : vector<8x64xf32>
    %cst_18 = arith.constant 1.000000e+00 : f32
    %54 = vector.broadcast %cst_18 : f32 to vector<8x64xf32>
    %55 = arith.addf %54, %53 : vector<8x64xf32>
    %56 = arith.divf %54, %55 : vector<8x64xf32>
    %57 = vector.extract_strided_slice %56 {offsets = [0, 0], sizes = [8, 32], strides = [1, 1]} : vector<8x64xf32> to vector<8x32xf32>
    %58 = vector.extract_strided_slice %56 {offsets = [0, 32], sizes = [8, 32], strides = [1, 1]} : vector<8x64xf32> to vector<8x32xf32>
    %59 = vector.extract_strided_slice %50 {offsets = [0, 64], sizes = [8, 32], strides = [1, 1]} : vector<8x128xf32> to vector<8x32xf32>
    %60 = vector.extract_strided_slice %50 {offsets = [0, 96], sizes = [8, 32], strides = [1, 1]} : vector<8x128xf32> to vector<8x32xf32>
    %61 = arith.mulf %57, %60 : vector<8x32xf32>
    %62 = arith.addf %59, %61 : vector<8x32xf32>
    %63 = math.tanh %62 : vector<8x32xf32>
    %cst_19 = arith.constant 1.000000e+00 : f32
    %64 = vector.broadcast %cst_19 : f32 to vector<8x32xf32>
    %65 = arith.subf %64, %58 : vector<8x32xf32>
    %66 = arith.mulf %65, %63 : vector<8x32xf32>
    %67 = arith.mulf %58, %28 : vector<8x32xf32>
    %68 = arith.addf %66, %67 : vector<8x32xf32>
    %69 = tpu.concatenate %68, %47 in 1 : vector<8x32xf32>, vector<8x32xf32> -> vector<8x64xf32>
    %cst_20 = arith.constant dense<0.000000e+00> : vector<8x128xf32>
    %70 = tpu.matmul %69, %8, %cst_20 {dimension_numbers = #tpu.dot_dimension_numbers<[1], [0], [0], [1], [0, 0, 1, 1], [], []>} : vector<8x64xf32>, vector<64x128xf32>, vector<8x128xf32> -> vector<8x128xf32>
    %71 = arith.addf %70, %11 : vector<8x128xf32>
    %72 = vector.extract_strided_slice %71 {offsets = [0, 0], sizes = [8, 64], strides = [1, 1]} : vector<8x128xf32> to vector<8x64xf32>
    %73 = arith.negf %72 : vector<8x64xf32>
    %74 = math.exp %73 : vector<8x64xf32>
    %cst_21 = arith.constant 1.000000e+00 : f32
    %75 = vector.broadcast %cst_21 : f32 to vector<8x64xf32>
    %76 = arith.addf %75, %74 : vector<8x64xf32>
    %77 = arith.divf %75, %76 : vector<8x64xf32>
    %78 = vector.extract_strided_slice %77 {offsets = [0, 0], sizes = [8, 32], strides = [1, 1]} : vector<8x64xf32> to vector<8x32xf32>
    %79 = vector.extract_strided_slice %77 {offsets = [0, 32], sizes = [8, 32], strides = [1, 1]} : vector<8x64xf32> to vector<8x32xf32>
    %80 = vector.extract_strided_slice %71 {offsets = [0, 64], sizes = [8, 32], strides = [1, 1]} : vector<8x128xf32> to vector<8x32xf32>
    %81 = vector.extract_strided_slice %71 {offsets = [0, 96], sizes = [8, 32], strides = [1, 1]} : vector<8x128xf32> to vector<8x32xf32>
    %82 = arith.mulf %78, %81 : vector<8x32xf32>
    %83 = arith.addf %80, %82 : vector<8x32xf32>
    %84 = math.tanh %83 : vector<8x32xf32>
    %cst_22 = arith.constant 1.000000e+00 : f32
    %85 = vector.broadcast %cst_22 : f32 to vector<8x32xf32>
    %86 = arith.subf %85, %79 : vector<8x32xf32>
    %87 = arith.mulf %86, %84 : vector<8x32xf32>
    %88 = arith.mulf %79, %47 : vector<8x32xf32>
    %89 = arith.addf %87, %88 : vector<8x32xf32>
    %90 = vector.extract_strided_slice %7 {offsets = [16, 0], sizes = [8, 128], strides = [1, 1]} : vector<64x128xf32> to vector<8x128xf32>
    %cst_23 = arith.constant dense<0.000000e+00> : vector<8x128xf32>
    %91 = tpu.matmul %68, %1, %cst_23 {dimension_numbers = #tpu.dot_dimension_numbers<[1], [0], [0], [1], [0, 0, 1, 1], [], []>} : vector<8x32xf32>, vector<32x128xf32>, vector<8x128xf32> -> vector<8x128xf32>
    %92 = arith.addf %90, %91 : vector<8x128xf32>
    %93 = vector.extract_strided_slice %92 {offsets = [0, 0], sizes = [8, 64], strides = [1, 1]} : vector<8x128xf32> to vector<8x64xf32>
    %94 = arith.negf %93 : vector<8x64xf32>
    %95 = math.exp %94 : vector<8x64xf32>
    %cst_24 = arith.constant 1.000000e+00 : f32
    %96 = vector.broadcast %cst_24 : f32 to vector<8x64xf32>
    %97 = arith.addf %96, %95 : vector<8x64xf32>
    %98 = arith.divf %96, %97 : vector<8x64xf32>
    %99 = vector.extract_strided_slice %98 {offsets = [0, 0], sizes = [8, 32], strides = [1, 1]} : vector<8x64xf32> to vector<8x32xf32>
    %100 = vector.extract_strided_slice %98 {offsets = [0, 32], sizes = [8, 32], strides = [1, 1]} : vector<8x64xf32> to vector<8x32xf32>
    %101 = vector.extract_strided_slice %92 {offsets = [0, 64], sizes = [8, 32], strides = [1, 1]} : vector<8x128xf32> to vector<8x32xf32>
    %102 = vector.extract_strided_slice %92 {offsets = [0, 96], sizes = [8, 32], strides = [1, 1]} : vector<8x128xf32> to vector<8x32xf32>
    %103 = arith.mulf %99, %102 : vector<8x32xf32>
    %104 = arith.addf %101, %103 : vector<8x32xf32>
    %105 = math.tanh %104 : vector<8x32xf32>
    %cst_25 = arith.constant 1.000000e+00 : f32
    %106 = vector.broadcast %cst_25 : f32 to vector<8x32xf32>
    %107 = arith.subf %106, %100 : vector<8x32xf32>
    %108 = arith.mulf %107, %105 : vector<8x32xf32>
    %109 = arith.mulf %100, %68 : vector<8x32xf32>
    %110 = arith.addf %108, %109 : vector<8x32xf32>
    %111 = tpu.concatenate %110, %89 in 1 : vector<8x32xf32>, vector<8x32xf32> -> vector<8x64xf32>
    %cst_26 = arith.constant dense<0.000000e+00> : vector<8x128xf32>
    %112 = tpu.matmul %111, %8, %cst_26 {dimension_numbers = #tpu.dot_dimension_numbers<[1], [0], [0], [1], [0, 0, 1, 1], [], []>} : vector<8x64xf32>, vector<64x128xf32>, vector<8x128xf32> -> vector<8x128xf32>
    %113 = arith.addf %112, %11 : vector<8x128xf32>
    %114 = vector.extract_strided_slice %113 {offsets = [0, 0], sizes = [8, 64], strides = [1, 1]} : vector<8x128xf32> to vector<8x64xf32>
    %115 = arith.negf %114 : vector<8x64xf32>
    %116 = math.exp %115 : vector<8x64xf32>
    %cst_27 = arith.constant 1.000000e+00 : f32
    %117 = vector.broadcast %cst_27 : f32 to vector<8x64xf32>
    %118 = arith.addf %117, %116 : vector<8x64xf32>
    %119 = arith.divf %117, %118 : vector<8x64xf32>
    %120 = vector.extract_strided_slice %119 {offsets = [0, 0], sizes = [8, 32], strides = [1, 1]} : vector<8x64xf32> to vector<8x32xf32>
    %121 = vector.extract_strided_slice %119 {offsets = [0, 32], sizes = [8, 32], strides = [1, 1]} : vector<8x64xf32> to vector<8x32xf32>
    %122 = vector.extract_strided_slice %113 {offsets = [0, 64], sizes = [8, 32], strides = [1, 1]} : vector<8x128xf32> to vector<8x32xf32>
    %123 = vector.extract_strided_slice %113 {offsets = [0, 96], sizes = [8, 32], strides = [1, 1]} : vector<8x128xf32> to vector<8x32xf32>
    %124 = arith.mulf %120, %123 : vector<8x32xf32>
    %125 = arith.addf %122, %124 : vector<8x32xf32>
    %126 = math.tanh %125 : vector<8x32xf32>
    %cst_28 = arith.constant 1.000000e+00 : f32
    %127 = vector.broadcast %cst_28 : f32 to vector<8x32xf32>
    %128 = arith.subf %127, %121 : vector<8x32xf32>
    %129 = arith.mulf %128, %126 : vector<8x32xf32>
    %130 = arith.mulf %121, %89 : vector<8x32xf32>
    %131 = arith.addf %129, %130 : vector<8x32xf32>
    %132 = vector.extract_strided_slice %7 {offsets = [24, 0], sizes = [8, 128], strides = [1, 1]} : vector<64x128xf32> to vector<8x128xf32>
    %cst_29 = arith.constant dense<0.000000e+00> : vector<8x128xf32>
    %133 = tpu.matmul %110, %1, %cst_29 {dimension_numbers = #tpu.dot_dimension_numbers<[1], [0], [0], [1], [0, 0, 1, 1], [], []>} : vector<8x32xf32>, vector<32x128xf32>, vector<8x128xf32> -> vector<8x128xf32>
    %134 = arith.addf %132, %133 : vector<8x128xf32>
    %135 = vector.extract_strided_slice %134 {offsets = [0, 0], sizes = [8, 64], strides = [1, 1]} : vector<8x128xf32> to vector<8x64xf32>
    %136 = arith.negf %135 : vector<8x64xf32>
    %137 = math.exp %136 : vector<8x64xf32>
    %cst_30 = arith.constant 1.000000e+00 : f32
    %138 = vector.broadcast %cst_30 : f32 to vector<8x64xf32>
    %139 = arith.addf %138, %137 : vector<8x64xf32>
    %140 = arith.divf %138, %139 : vector<8x64xf32>
    %141 = vector.extract_strided_slice %140 {offsets = [0, 0], sizes = [8, 32], strides = [1, 1]} : vector<8x64xf32> to vector<8x32xf32>
    %142 = vector.extract_strided_slice %140 {offsets = [0, 32], sizes = [8, 32], strides = [1, 1]} : vector<8x64xf32> to vector<8x32xf32>
    %143 = vector.extract_strided_slice %134 {offsets = [0, 64], sizes = [8, 32], strides = [1, 1]} : vector<8x128xf32> to vector<8x32xf32>
    %144 = vector.extract_strided_slice %134 {offsets = [0, 96], sizes = [8, 32], strides = [1, 1]} : vector<8x128xf32> to vector<8x32xf32>
    %145 = arith.mulf %141, %144 : vector<8x32xf32>
    %146 = arith.addf %143, %145 : vector<8x32xf32>
    %147 = math.tanh %146 : vector<8x32xf32>
    %cst_31 = arith.constant 1.000000e+00 : f32
    %148 = vector.broadcast %cst_31 : f32 to vector<8x32xf32>
    %149 = arith.subf %148, %142 : vector<8x32xf32>
    %150 = arith.mulf %149, %147 : vector<8x32xf32>
    %151 = arith.mulf %142, %110 : vector<8x32xf32>
    %152 = arith.addf %150, %151 : vector<8x32xf32>
    %153 = tpu.concatenate %152, %131 in 1 : vector<8x32xf32>, vector<8x32xf32> -> vector<8x64xf32>
    %cst_32 = arith.constant dense<0.000000e+00> : vector<8x128xf32>
    %154 = tpu.matmul %153, %8, %cst_32 {dimension_numbers = #tpu.dot_dimension_numbers<[1], [0], [0], [1], [0, 0, 1, 1], [], []>} : vector<8x64xf32>, vector<64x128xf32>, vector<8x128xf32> -> vector<8x128xf32>
    %155 = arith.addf %154, %11 : vector<8x128xf32>
    %156 = vector.extract_strided_slice %155 {offsets = [0, 0], sizes = [8, 64], strides = [1, 1]} : vector<8x128xf32> to vector<8x64xf32>
    %157 = arith.negf %156 : vector<8x64xf32>
    %158 = math.exp %157 : vector<8x64xf32>
    %cst_33 = arith.constant 1.000000e+00 : f32
    %159 = vector.broadcast %cst_33 : f32 to vector<8x64xf32>
    %160 = arith.addf %159, %158 : vector<8x64xf32>
    %161 = arith.divf %159, %160 : vector<8x64xf32>
    %162 = vector.extract_strided_slice %161 {offsets = [0, 0], sizes = [8, 32], strides = [1, 1]} : vector<8x64xf32> to vector<8x32xf32>
    %163 = vector.extract_strided_slice %161 {offsets = [0, 32], sizes = [8, 32], strides = [1, 1]} : vector<8x64xf32> to vector<8x32xf32>
    %164 = vector.extract_strided_slice %155 {offsets = [0, 64], sizes = [8, 32], strides = [1, 1]} : vector<8x128xf32> to vector<8x32xf32>
    %165 = vector.extract_strided_slice %155 {offsets = [0, 96], sizes = [8, 32], strides = [1, 1]} : vector<8x128xf32> to vector<8x32xf32>
    %166 = arith.mulf %162, %165 : vector<8x32xf32>
    %167 = arith.addf %164, %166 : vector<8x32xf32>
    %168 = math.tanh %167 : vector<8x32xf32>
    %cst_34 = arith.constant 1.000000e+00 : f32
    %169 = vector.broadcast %cst_34 : f32 to vector<8x32xf32>
    %170 = arith.subf %169, %163 : vector<8x32xf32>
    %171 = arith.mulf %170, %168 : vector<8x32xf32>
    %172 = arith.mulf %163, %131 : vector<8x32xf32>
    %173 = arith.addf %171, %172 : vector<8x32xf32>
    %174 = vector.extract_strided_slice %7 {offsets = [32, 0], sizes = [8, 128], strides = [1, 1]} : vector<64x128xf32> to vector<8x128xf32>
    %cst_35 = arith.constant dense<0.000000e+00> : vector<8x128xf32>
    %175 = tpu.matmul %152, %1, %cst_35 {dimension_numbers = #tpu.dot_dimension_numbers<[1], [0], [0], [1], [0, 0, 1, 1], [], []>} : vector<8x32xf32>, vector<32x128xf32>, vector<8x128xf32> -> vector<8x128xf32>
    %176 = arith.addf %174, %175 : vector<8x128xf32>
    %177 = vector.extract_strided_slice %176 {offsets = [0, 0], sizes = [8, 64], strides = [1, 1]} : vector<8x128xf32> to vector<8x64xf32>
    %178 = arith.negf %177 : vector<8x64xf32>
    %179 = math.exp %178 : vector<8x64xf32>
    %cst_36 = arith.constant 1.000000e+00 : f32
    %180 = vector.broadcast %cst_36 : f32 to vector<8x64xf32>
    %181 = arith.addf %180, %179 : vector<8x64xf32>
    %182 = arith.divf %180, %181 : vector<8x64xf32>
    %183 = vector.extract_strided_slice %182 {offsets = [0, 0], sizes = [8, 32], strides = [1, 1]} : vector<8x64xf32> to vector<8x32xf32>
    %184 = vector.extract_strided_slice %182 {offsets = [0, 32], sizes = [8, 32], strides = [1, 1]} : vector<8x64xf32> to vector<8x32xf32>
    %185 = vector.extract_strided_slice %176 {offsets = [0, 64], sizes = [8, 32], strides = [1, 1]} : vector<8x128xf32> to vector<8x32xf32>
    %186 = vector.extract_strided_slice %176 {offsets = [0, 96], sizes = [8, 32], strides = [1, 1]} : vector<8x128xf32> to vector<8x32xf32>
    %187 = arith.mulf %183, %186 : vector<8x32xf32>
    %188 = arith.addf %185, %187 : vector<8x32xf32>
    %189 = math.tanh %188 : vector<8x32xf32>
    %cst_37 = arith.constant 1.000000e+00 : f32
    %190 = vector.broadcast %cst_37 : f32 to vector<8x32xf32>
    %191 = arith.subf %190, %184 : vector<8x32xf32>
    %192 = arith.mulf %191, %189 : vector<8x32xf32>
    %193 = arith.mulf %184, %152 : vector<8x32xf32>
    %194 = arith.addf %192, %193 : vector<8x32xf32>
    %195 = tpu.concatenate %194, %173 in 1 : vector<8x32xf32>, vector<8x32xf32> -> vector<8x64xf32>
    %cst_38 = arith.constant dense<0.000000e+00> : vector<8x128xf32>
    %196 = tpu.matmul %195, %8, %cst_38 {dimension_numbers = #tpu.dot_dimension_numbers<[1], [0], [0], [1], [0, 0, 1, 1], [], []>} : vector<8x64xf32>, vector<64x128xf32>, vector<8x128xf32> -> vector<8x128xf32>
    %197 = arith.addf %196, %11 : vector<8x128xf32>
    %198 = vector.extract_strided_slice %197 {offsets = [0, 0], sizes = [8, 64], strides = [1, 1]} : vector<8x128xf32> to vector<8x64xf32>
    %199 = arith.negf %198 : vector<8x64xf32>
    %200 = math.exp %199 : vector<8x64xf32>
    %cst_39 = arith.constant 1.000000e+00 : f32
    %201 = vector.broadcast %cst_39 : f32 to vector<8x64xf32>
    %202 = arith.addf %201, %200 : vector<8x64xf32>
    %203 = arith.divf %201, %202 : vector<8x64xf32>
    %204 = vector.extract_strided_slice %203 {offsets = [0, 0], sizes = [8, 32], strides = [1, 1]} : vector<8x64xf32> to vector<8x32xf32>
    %205 = vector.extract_strided_slice %203 {offsets = [0, 32], sizes = [8, 32], strides = [1, 1]} : vector<8x64xf32> to vector<8x32xf32>
    %206 = vector.extract_strided_slice %197 {offsets = [0, 64], sizes = [8, 32], strides = [1, 1]} : vector<8x128xf32> to vector<8x32xf32>
    %207 = vector.extract_strided_slice %197 {offsets = [0, 96], sizes = [8, 32], strides = [1, 1]} : vector<8x128xf32> to vector<8x32xf32>
    %208 = arith.mulf %204, %207 : vector<8x32xf32>
    %209 = arith.addf %206, %208 : vector<8x32xf32>
    %210 = math.tanh %209 : vector<8x32xf32>
    %cst_40 = arith.constant 1.000000e+00 : f32
    %211 = vector.broadcast %cst_40 : f32 to vector<8x32xf32>
    %212 = arith.subf %211, %205 : vector<8x32xf32>
    %213 = arith.mulf %212, %210 : vector<8x32xf32>
    %214 = arith.mulf %205, %173 : vector<8x32xf32>
    %215 = arith.addf %213, %214 : vector<8x32xf32>
    %216 = vector.extract_strided_slice %7 {offsets = [40, 0], sizes = [8, 128], strides = [1, 1]} : vector<64x128xf32> to vector<8x128xf32>
    %cst_41 = arith.constant dense<0.000000e+00> : vector<8x128xf32>
    %217 = tpu.matmul %194, %1, %cst_41 {dimension_numbers = #tpu.dot_dimension_numbers<[1], [0], [0], [1], [0, 0, 1, 1], [], []>} : vector<8x32xf32>, vector<32x128xf32>, vector<8x128xf32> -> vector<8x128xf32>
    %218 = arith.addf %216, %217 : vector<8x128xf32>
    %219 = vector.extract_strided_slice %218 {offsets = [0, 0], sizes = [8, 64], strides = [1, 1]} : vector<8x128xf32> to vector<8x64xf32>
    %220 = arith.negf %219 : vector<8x64xf32>
    %221 = math.exp %220 : vector<8x64xf32>
    %cst_42 = arith.constant 1.000000e+00 : f32
    %222 = vector.broadcast %cst_42 : f32 to vector<8x64xf32>
    %223 = arith.addf %222, %221 : vector<8x64xf32>
    %224 = arith.divf %222, %223 : vector<8x64xf32>
    %225 = vector.extract_strided_slice %224 {offsets = [0, 0], sizes = [8, 32], strides = [1, 1]} : vector<8x64xf32> to vector<8x32xf32>
    %226 = vector.extract_strided_slice %224 {offsets = [0, 32], sizes = [8, 32], strides = [1, 1]} : vector<8x64xf32> to vector<8x32xf32>
    %227 = vector.extract_strided_slice %218 {offsets = [0, 64], sizes = [8, 32], strides = [1, 1]} : vector<8x128xf32> to vector<8x32xf32>
    %228 = vector.extract_strided_slice %218 {offsets = [0, 96], sizes = [8, 32], strides = [1, 1]} : vector<8x128xf32> to vector<8x32xf32>
    %229 = arith.mulf %225, %228 : vector<8x32xf32>
    %230 = arith.addf %227, %229 : vector<8x32xf32>
    %231 = math.tanh %230 : vector<8x32xf32>
    %cst_43 = arith.constant 1.000000e+00 : f32
    %232 = vector.broadcast %cst_43 : f32 to vector<8x32xf32>
    %233 = arith.subf %232, %226 : vector<8x32xf32>
    %234 = arith.mulf %233, %231 : vector<8x32xf32>
    %235 = arith.mulf %226, %194 : vector<8x32xf32>
    %236 = arith.addf %234, %235 : vector<8x32xf32>
    %237 = tpu.concatenate %236, %215 in 1 : vector<8x32xf32>, vector<8x32xf32> -> vector<8x64xf32>
    %cst_44 = arith.constant dense<0.000000e+00> : vector<8x128xf32>
    %238 = tpu.matmul %237, %8, %cst_44 {dimension_numbers = #tpu.dot_dimension_numbers<[1], [0], [0], [1], [0, 0, 1, 1], [], []>} : vector<8x64xf32>, vector<64x128xf32>, vector<8x128xf32> -> vector<8x128xf32>
    %239 = arith.addf %238, %11 : vector<8x128xf32>
    %240 = vector.extract_strided_slice %239 {offsets = [0, 0], sizes = [8, 64], strides = [1, 1]} : vector<8x128xf32> to vector<8x64xf32>
    %241 = arith.negf %240 : vector<8x64xf32>
    %242 = math.exp %241 : vector<8x64xf32>
    %cst_45 = arith.constant 1.000000e+00 : f32
    %243 = vector.broadcast %cst_45 : f32 to vector<8x64xf32>
    %244 = arith.addf %243, %242 : vector<8x64xf32>
    %245 = arith.divf %243, %244 : vector<8x64xf32>
    %246 = vector.extract_strided_slice %245 {offsets = [0, 0], sizes = [8, 32], strides = [1, 1]} : vector<8x64xf32> to vector<8x32xf32>
    %247 = vector.extract_strided_slice %245 {offsets = [0, 32], sizes = [8, 32], strides = [1, 1]} : vector<8x64xf32> to vector<8x32xf32>
    %248 = vector.extract_strided_slice %239 {offsets = [0, 64], sizes = [8, 32], strides = [1, 1]} : vector<8x128xf32> to vector<8x32xf32>
    %249 = vector.extract_strided_slice %239 {offsets = [0, 96], sizes = [8, 32], strides = [1, 1]} : vector<8x128xf32> to vector<8x32xf32>
    %250 = arith.mulf %246, %249 : vector<8x32xf32>
    %251 = arith.addf %248, %250 : vector<8x32xf32>
    %252 = math.tanh %251 : vector<8x32xf32>
    %cst_46 = arith.constant 1.000000e+00 : f32
    %253 = vector.broadcast %cst_46 : f32 to vector<8x32xf32>
    %254 = arith.subf %253, %247 : vector<8x32xf32>
    %255 = arith.mulf %254, %252 : vector<8x32xf32>
    %256 = arith.mulf %247, %215 : vector<8x32xf32>
    %257 = arith.addf %255, %256 : vector<8x32xf32>
    %258 = vector.extract_strided_slice %7 {offsets = [48, 0], sizes = [8, 128], strides = [1, 1]} : vector<64x128xf32> to vector<8x128xf32>
    %cst_47 = arith.constant dense<0.000000e+00> : vector<8x128xf32>
    %259 = tpu.matmul %236, %1, %cst_47 {dimension_numbers = #tpu.dot_dimension_numbers<[1], [0], [0], [1], [0, 0, 1, 1], [], []>} : vector<8x32xf32>, vector<32x128xf32>, vector<8x128xf32> -> vector<8x128xf32>
    %260 = arith.addf %258, %259 : vector<8x128xf32>
    %261 = vector.extract_strided_slice %260 {offsets = [0, 0], sizes = [8, 64], strides = [1, 1]} : vector<8x128xf32> to vector<8x64xf32>
    %262 = arith.negf %261 : vector<8x64xf32>
    %263 = math.exp %262 : vector<8x64xf32>
    %cst_48 = arith.constant 1.000000e+00 : f32
    %264 = vector.broadcast %cst_48 : f32 to vector<8x64xf32>
    %265 = arith.addf %264, %263 : vector<8x64xf32>
    %266 = arith.divf %264, %265 : vector<8x64xf32>
    %267 = vector.extract_strided_slice %266 {offsets = [0, 0], sizes = [8, 32], strides = [1, 1]} : vector<8x64xf32> to vector<8x32xf32>
    %268 = vector.extract_strided_slice %266 {offsets = [0, 32], sizes = [8, 32], strides = [1, 1]} : vector<8x64xf32> to vector<8x32xf32>
    %269 = vector.extract_strided_slice %260 {offsets = [0, 64], sizes = [8, 32], strides = [1, 1]} : vector<8x128xf32> to vector<8x32xf32>
    %270 = vector.extract_strided_slice %260 {offsets = [0, 96], sizes = [8, 32], strides = [1, 1]} : vector<8x128xf32> to vector<8x32xf32>
    %271 = arith.mulf %267, %270 : vector<8x32xf32>
    %272 = arith.addf %269, %271 : vector<8x32xf32>
    %273 = math.tanh %272 : vector<8x32xf32>
    %cst_49 = arith.constant 1.000000e+00 : f32
    %274 = vector.broadcast %cst_49 : f32 to vector<8x32xf32>
    %275 = arith.subf %274, %268 : vector<8x32xf32>
    %276 = arith.mulf %275, %273 : vector<8x32xf32>
    %277 = arith.mulf %268, %236 : vector<8x32xf32>
    %278 = arith.addf %276, %277 : vector<8x32xf32>
    %279 = tpu.concatenate %278, %257 in 1 : vector<8x32xf32>, vector<8x32xf32> -> vector<8x64xf32>
    %cst_50 = arith.constant dense<0.000000e+00> : vector<8x128xf32>
    %280 = tpu.matmul %279, %8, %cst_50 {dimension_numbers = #tpu.dot_dimension_numbers<[1], [0], [0], [1], [0, 0, 1, 1], [], []>} : vector<8x64xf32>, vector<64x128xf32>, vector<8x128xf32> -> vector<8x128xf32>
    %281 = arith.addf %280, %11 : vector<8x128xf32>
    %282 = vector.extract_strided_slice %281 {offsets = [0, 0], sizes = [8, 64], strides = [1, 1]} : vector<8x128xf32> to vector<8x64xf32>
    %283 = arith.negf %282 : vector<8x64xf32>
    %284 = math.exp %283 : vector<8x64xf32>
    %cst_51 = arith.constant 1.000000e+00 : f32
    %285 = vector.broadcast %cst_51 : f32 to vector<8x64xf32>
    %286 = arith.addf %285, %284 : vector<8x64xf32>
    %287 = arith.divf %285, %286 : vector<8x64xf32>
    %288 = vector.extract_strided_slice %287 {offsets = [0, 0], sizes = [8, 32], strides = [1, 1]} : vector<8x64xf32> to vector<8x32xf32>
    %289 = vector.extract_strided_slice %287 {offsets = [0, 32], sizes = [8, 32], strides = [1, 1]} : vector<8x64xf32> to vector<8x32xf32>
    %290 = vector.extract_strided_slice %281 {offsets = [0, 64], sizes = [8, 32], strides = [1, 1]} : vector<8x128xf32> to vector<8x32xf32>
    %291 = vector.extract_strided_slice %281 {offsets = [0, 96], sizes = [8, 32], strides = [1, 1]} : vector<8x128xf32> to vector<8x32xf32>
    %292 = arith.mulf %288, %291 : vector<8x32xf32>
    %293 = arith.addf %290, %292 : vector<8x32xf32>
    %294 = math.tanh %293 : vector<8x32xf32>
    %cst_52 = arith.constant 1.000000e+00 : f32
    %295 = vector.broadcast %cst_52 : f32 to vector<8x32xf32>
    %296 = arith.subf %295, %289 : vector<8x32xf32>
    %297 = arith.mulf %296, %294 : vector<8x32xf32>
    %298 = arith.mulf %289, %257 : vector<8x32xf32>
    %299 = arith.addf %297, %298 : vector<8x32xf32>
    %300 = vector.extract_strided_slice %7 {offsets = [56, 0], sizes = [8, 128], strides = [1, 1]} : vector<64x128xf32> to vector<8x128xf32>
    %cst_53 = arith.constant dense<0.000000e+00> : vector<8x128xf32>
    %301 = tpu.matmul %278, %1, %cst_53 {dimension_numbers = #tpu.dot_dimension_numbers<[1], [0], [0], [1], [0, 0, 1, 1], [], []>} : vector<8x32xf32>, vector<32x128xf32>, vector<8x128xf32> -> vector<8x128xf32>
    %302 = arith.addf %300, %301 : vector<8x128xf32>
    %303 = vector.extract_strided_slice %302 {offsets = [0, 0], sizes = [8, 64], strides = [1, 1]} : vector<8x128xf32> to vector<8x64xf32>
    %304 = arith.negf %303 : vector<8x64xf32>
    %305 = math.exp %304 : vector<8x64xf32>
    %cst_54 = arith.constant 1.000000e+00 : f32
    %306 = vector.broadcast %cst_54 : f32 to vector<8x64xf32>
    %307 = arith.addf %306, %305 : vector<8x64xf32>
    %308 = arith.divf %306, %307 : vector<8x64xf32>
    %309 = vector.extract_strided_slice %308 {offsets = [0, 0], sizes = [8, 32], strides = [1, 1]} : vector<8x64xf32> to vector<8x32xf32>
    %310 = vector.extract_strided_slice %308 {offsets = [0, 32], sizes = [8, 32], strides = [1, 1]} : vector<8x64xf32> to vector<8x32xf32>
    %311 = vector.extract_strided_slice %302 {offsets = [0, 64], sizes = [8, 32], strides = [1, 1]} : vector<8x128xf32> to vector<8x32xf32>
    %312 = vector.extract_strided_slice %302 {offsets = [0, 96], sizes = [8, 32], strides = [1, 1]} : vector<8x128xf32> to vector<8x32xf32>
    %313 = arith.mulf %309, %312 : vector<8x32xf32>
    %314 = arith.addf %311, %313 : vector<8x32xf32>
    %315 = math.tanh %314 : vector<8x32xf32>
    %cst_55 = arith.constant 1.000000e+00 : f32
    %316 = vector.broadcast %cst_55 : f32 to vector<8x32xf32>
    %317 = arith.subf %316, %310 : vector<8x32xf32>
    %318 = arith.mulf %317, %315 : vector<8x32xf32>
    %319 = arith.mulf %310, %278 : vector<8x32xf32>
    %320 = arith.addf %318, %319 : vector<8x32xf32>
    %321 = tpu.concatenate %320, %299 in 1 : vector<8x32xf32>, vector<8x32xf32> -> vector<8x64xf32>
    %cst_56 = arith.constant dense<0.000000e+00> : vector<8x128xf32>
    %322 = tpu.matmul %321, %8, %cst_56 {dimension_numbers = #tpu.dot_dimension_numbers<[1], [0], [0], [1], [0, 0, 1, 1], [], []>} : vector<8x64xf32>, vector<64x128xf32>, vector<8x128xf32> -> vector<8x128xf32>
    %323 = arith.addf %322, %11 : vector<8x128xf32>
    %324 = vector.extract_strided_slice %323 {offsets = [0, 0], sizes = [8, 64], strides = [1, 1]} : vector<8x128xf32> to vector<8x64xf32>
    %325 = arith.negf %324 : vector<8x64xf32>
    %326 = math.exp %325 : vector<8x64xf32>
    %cst_57 = arith.constant 1.000000e+00 : f32
    %327 = vector.broadcast %cst_57 : f32 to vector<8x64xf32>
    %328 = arith.addf %327, %326 : vector<8x64xf32>
    %329 = arith.divf %327, %328 : vector<8x64xf32>
    %330 = vector.extract_strided_slice %329 {offsets = [0, 0], sizes = [8, 32], strides = [1, 1]} : vector<8x64xf32> to vector<8x32xf32>
    %331 = vector.extract_strided_slice %329 {offsets = [0, 32], sizes = [8, 32], strides = [1, 1]} : vector<8x64xf32> to vector<8x32xf32>
    %332 = vector.extract_strided_slice %323 {offsets = [0, 64], sizes = [8, 32], strides = [1, 1]} : vector<8x128xf32> to vector<8x32xf32>
    %333 = vector.extract_strided_slice %323 {offsets = [0, 96], sizes = [8, 32], strides = [1, 1]} : vector<8x128xf32> to vector<8x32xf32>
    %334 = arith.mulf %330, %333 : vector<8x32xf32>
    %335 = arith.addf %332, %334 : vector<8x32xf32>
    %336 = math.tanh %335 : vector<8x32xf32>
    %cst_58 = arith.constant 1.000000e+00 : f32
    %337 = vector.broadcast %cst_58 : f32 to vector<8x32xf32>
    %338 = arith.subf %337, %331 : vector<8x32xf32>
    %339 = arith.mulf %338, %336 : vector<8x32xf32>
    %340 = arith.mulf %331, %299 : vector<8x32xf32>
    %341 = arith.addf %339, %340 : vector<8x32xf32>
    %c0_59 = arith.constant 0 : index
    %c0_60 = arith.constant 0 : index
    %342 = vector.load %arg6[%c0_59, %c0_60] : memref<32x16xf32, #tpu.memory_space<vmem>>, vector<32x16xf32>
    %cst_61 = arith.constant dense<0.000000e+00> : vector<8x16xf32>
    %343 = tpu.matmul %341, %342, %cst_61 {dimension_numbers = #tpu.dot_dimension_numbers<[1], [0], [0], [1], [0, 0, 1, 1], [], []>} : vector<8x32xf32>, vector<32x16xf32>, vector<8x16xf32> -> vector<8x16xf32>
    %c0_62 = arith.constant 0 : index
    %c0_63 = arith.constant 0 : index
    %344 = vector.load %arg7[%c0_62, %c0_63] : memref<1x16xf32, #tpu.memory_space<vmem>>, vector<1x16xf32>
    %345 = vector.broadcast %344 : vector<1x16xf32> to vector<8x16xf32>
    %346 = arith.addf %343, %345 : vector<8x16xf32>
    %cst_64 = arith.constant 0.000000e+00 : f32
    %347 = vector.broadcast %cst_64 : f32 to vector<8x16xf32>
    %348 = arith.maximumf %346, %347 : vector<8x16xf32>
    %c0_65 = arith.constant 0 : index
    %c0_66 = arith.constant 0 : index
    %349 = vector.load %arg8[%c0_65, %c0_66] : memref<16x1xf32, #tpu.memory_space<vmem>>, vector<16x1xf32>
    %cst_67 = arith.constant dense<0.000000e+00> : vector<8x1xf32>
    %350 = tpu.matmul %348, %349, %cst_67 {dimension_numbers = #tpu.dot_dimension_numbers<[1], [0], [0], [1], [0, 0, 1, 1], [], []>} : vector<8x16xf32>, vector<16x1xf32>, vector<8x1xf32> -> vector<8x1xf32>
    %c0_68 = arith.constant 0 : index
    %c0_69 = arith.constant 0 : index
    %351 = vector.load %arg9[%c0_68, %c0_69] : memref<1x1xf32, #tpu.memory_space<vmem>>, vector<1x1xf32>
    %352 = vector.broadcast %351 : vector<1x1xf32> to vector<8x1xf32>
    %353 = arith.addf %350, %352 : vector<8x1xf32>
    %c0_70 = arith.constant 0 : index
    %c0_71 = arith.constant 0 : index
    %354 = vector.load %arg10[%c0_70, %c0_71] : memref<8x1xf32, #tpu.memory_space<vmem>>, vector<8x1xf32>
    tpu.vector_store %arg10[%c0_70, %c0_71], %353 {strides = array<i32>} : memref<8x1xf32, #tpu.memory_space<vmem>>, vector<8x1xf32>,
    return
  }
}

</mosaic_0001>

<llo_original>
// kernel: earth_systems_rnn_forward.1
$region0: #{earth_systems_rnn_forward.1}
  #allocation0 [shape = 'u32[]', space=smem, size = 0x4, offset = 0x4, fixed_abs, tag = 'smem constant byte address 0x4 - core index']
  #allocation1 [shape = 'u32[144,128]{1,0:T(1,128)}', space=vmem, size = 0x12000, scoped, tag = 'internal scratch']
  #allocation2 [shape = 'f32[1,1]{1,0:T(1,128)S(1)}', space=vmem, size = 0x200, scoped, tag = 'scoped memory for earth_systems_rnn_forward.1']
  %s0 = inlined_call_operand.vmem [shape: f32[8,8,4], index: 0, kind: input, shape index: {}]
  %s1 = inlined_call_operand.vmem [shape: f32[4,128], index: 1, kind: input, shape index: {}]
  %s2 = inlined_call_operand.vmem [shape: f32[32,128], index: 2, kind: input, shape index: {}]
  %s3 = inlined_call_operand.vmem [shape: f32[1,128], index: 3, kind: input, shape index: {}]
  %s4 = inlined_call_operand.vmem [shape: f32[64,128], index: 4, kind: input, shape index: {}]
  %s5 = inlined_call_operand.vmem [shape: f32[1,128], index: 5, kind: input, shape index: {}]
  %s6 = inlined_call_operand.vmem [shape: f32[32,16], index: 6, kind: input, shape index: {}]
  %s7 = inlined_call_operand.vmem [shape: f32[1,16], index: 7, kind: input, shape index: {}]
  %s8 = inlined_call_operand.vmem [shape: f32[16,1], index: 8, kind: input, shape index: {}]
  %s9 = inlined_call_operand.<no memory space> [shape: f32[1,1], index: 9, kind: input, shape index: {}]
  %s10 = inlined_call_operand.vmem [shape: f32[8,1], index: 10, kind: output, shape index: {}]
  %s11 = sld [smem:[#allocation0]]
  $region50: #{earth_systems_rnn_forward.1} parent=0
    _
  %s13 = ssub.s32 1, %s11
  %s14 = scalar_select 0, %s13, %s11
  %v15 = vstv %s9
  %16 = vst [vmem:[#allocation2] sm:$0x1] %v15
  // Predicated region
  $region2: #{earth_systems_rnn_forward.1} parent=0 // pred_check
    _
  $region3: #{earth_systems_rnn_forward.1} parent=0 // pred_check_branch
    %18 = sbr.rel (0) target = $region5
  $region4: #{earth_systems_rnn_forward.1} parent=0 // pred_region
    _
  $region5: #{earth_systems_rnn_forward.1} parent=0 // pred_fallthru
    _
  // Predicated region
  $region6: #{earth_systems_rnn_forward.1} parent=0 // pred_check
    _
  $region7: #{earth_systems_rnn_forward.1} parent=0 // pred_check_branch
    %20 = sbr.rel (0) target = $region9
  $region8: #{earth_systems_rnn_forward.1} parent=0 // pred_region
    _
  $region9: #{earth_systems_rnn_forward.1} parent=0 // pred_fallthru
    _
  // Predicated region
  $region10: #{earth_systems_rnn_forward.1} parent=0 // pred_check
    _
  $region11: #{earth_systems_rnn_forward.1} parent=0 // pred_check_branch
    %22 = sbr.rel (0) target = $region13
  $region12: #{earth_systems_rnn_forward.1} parent=0 // pred_region
    _
  $region13: #{earth_systems_rnn_forward.1} parent=0 // pred_fallthru
    _
  // Predicated region
  $region14: #{earth_systems_rnn_forward.1} parent=0 // pred_check
    _
  $region15: #{earth_systems_rnn_forward.1} parent=0 // pred_check_branch
    %24 = sbr.rel (0) target = $region17
  $region16: #{earth_systems_rnn_forward.1} parent=0 // pred_region
    _
  $region17: #{earth_systems_rnn_forward.1} parent=0 // pred_fallthru
    _
  // Predicated region
  $region18: #{earth_systems_rnn_forward.1} parent=0 // pred_check
    _
  $region19: #{earth_systems_rnn_forward.1} parent=0 // pred_check_branch
    %26 = sbr.rel (0) target = $region21
  $region20: #{earth_systems_rnn_forward.1} parent=0 // pred_region
    _
  $region21: #{earth_systems_rnn_forward.1} parent=0 // pred_fallthru
    _
  // Predicated region
  $region22: #{earth_systems_rnn_forward.1} parent=0 // pred_check
    _
  $region23: #{earth_systems_rnn_forward.1} parent=0 // pred_check_branch
    %28 = sbr.rel (0) target = $region25
  $region24: #{earth_systems_rnn_forward.1} parent=0 // pred_region
    _
  $region25: #{earth_systems_rnn_forward.1} parent=0 // pred_fallthru
    _
  // Predicated region
  $region26: #{earth_systems_rnn_forward.1} parent=0 // pred_check
    _
  $region27: #{earth_systems_rnn_forward.1} parent=0 // pred_check_branch
    %30 = sbr.rel (0) target = $region29
  $region28: #{earth_systems_rnn_forward.1} parent=0 // pred_region
    _
  $region29: #{earth_systems_rnn_forward.1} parent=0 // pred_fallthru
    _
  // Predicated region
  $region30: #{earth_systems_rnn_forward.1} parent=0 // pred_check
    _
  $region31: #{earth_systems_rnn_forward.1} parent=0 // pred_check_branch
    %32 = sbr.rel (0) target = $region33
  $region32: #{earth_systems_rnn_forward.1} parent=0 // pred_region
    _
  $region33: #{earth_systems_rnn_forward.1} parent=0 // pred_fallthru
    _
  // Predicated region
  $region34: #{earth_systems_rnn_forward.1} parent=0 // pred_check
    _
  $region35: #{earth_systems_rnn_forward.1} parent=0 // pred_check_branch
    %34 = sbr.rel (0) target = $region37
  $region36: #{earth_systems_rnn_forward.1} parent=0 // pred_region
    _
  $region37: #{earth_systems_rnn_forward.1} parent=0 // pred_fallthru
    _
  // Predicated region
  $region38: #{earth_systems_rnn_forward.1} parent=0 // pred_check
    _
  $region39: #{earth_systems_rnn_forward.1} parent=0 // pred_check_branch
    %36 = sbr.rel (0) target = $region41
  $region40: #{earth_systems_rnn_forward.1} parent=0 // pred_region
    _
  $region41: #{earth_systems_rnn_forward.1} parent=0 // pred_fallthru
    _
  %v37 = vld [vmem:[%s1] sm:$0xf]
  %v38 = vld [vmem:[%s2] sm:$0xff]
  %v39 = vld [vmem:[%s2 + $0x8] sm:$0xff]
  %v40 = vld [vmem:[%s2 + $0x10] sm:$0xff]
  %v41 = vld [vmem:[%s2 + $0x18] sm:$0xff]
  %v42 = vld [vmem:[%s3] sm:$0x1]
  %v43 = vld [vmem:[%s0] sm:$0xff]
  %v44 = vld [vmem:[%s0 + $0x8] sm:$0xff]
  %v45 = vld [vmem:[%s0 + $0x10] sm:$0xff]
  %v46 = vld [vmem:[%s0 + $0x18] sm:$0xff]
  %v47 = vld [vmem:[%s0 + $0x20] sm:$0xff]
  %v48 = vld [vmem:[%s0 + $0x28] sm:$0xff]
  %v49 = vld [vmem:[%s0 + $0x30] sm:$0xff]
  %v50 = vld [vmem:[%s0 + $0x38] sm:$0xff]
  %v52 = vlaneseq
  %v53 = vshrl.u32 %v52, 7
  %v54 = vsub.s32 0, %v53
  %v55 = vrot.slane %v42, %v54
  %vm57 = vcmask 31744
  %v59 = vsel %vm57, %v43, 0
  %v62 = vsel %vm57, %v44, 0
  %v65 = vsel %vm57, %v45, 0
  %v68 = vsel %vm57, %v46, 0
  %v71 = vsel %vm57, %v47, 0
  %v74 = vsel %vm57, %v48, 0
  %v77 = vsel %vm57, %v49, 0
  %v80 = vsel %vm57, %v50, 0
  %vm82 = vcmask 1043456
  %v84 = vsel %vm82, %v37, 0
  %86 = vmatprep.subr.mxu0 0.0
  %87 = vmatpush1.msra.mxu0 %v84
  %88 = vmatprep.subr.mxu0 0.0
  %89 = vmatpush1.msra.mxu0 0.0
  %90 = vmatprep.subr.mxu0 0.0
  %91 = vmatpush1.msra.mxu0 0.0
  %92 = vmatprep.subr.mxu0 0.0
  %93 = vmatpush1.msra.mxu0 0.0
  %94 = vmatprep.subr.mxu0 0.0
  %95 = vmatpush1.msra.mxu0 0.0
  %96 = vmatprep.subr.mxu0 0.0
  %97 = vmatpush1.msra.mxu0 0.0
  %98 = vmatprep.subr.mxu0 0.0
  %99 = vmatpush1.msra.mxu0 0.0
  %100 = vmatprep.subr.mxu0 0.0
  %101 = vmatpush1.msra.mxu0 0.0
  %102 = vmatprep.subr.mxu0 0.0
  %103 = vmatpush1.msra.mxu0 0.0
  %104 = vmatprep.subr.mxu0 0.0
  %105 = vmatpush1.msra.mxu0 0.0
  %106 = vmatprep.subr.mxu0 0.0
  %107 = vmatpush1.msra.mxu0 0.0
  %108 = vmatprep.subr.mxu0 0.0
  %109 = vmatpush1.msra.mxu0 0.0
  %110 = vmatprep.subr.mxu0 0.0
  %111 = vmatpush1.msra.mxu0 0.0
  %112 = vmatprep.subr.mxu0 0.0
  %113 = vmatpush1.msra.mxu0 0.0
  %114 = vmatprep.subr.mxu0 0.0
  %115 = vmatpush1.msra.mxu0 0.0
  %116 = vmatprep.subr.mxu0 0.0
  %117 = vmatpush1.msra.mxu0 0.0
  %118 = vmatprep.subr.mxu0 0.0
  %119 = vmatpush1.msra.mxu0 0.0
  %120 = vmatprep.subr.mxu0 0.0
  %121 = vmatpush1.msra.mxu0 0.0
  %122 = vmatprep.subr.mxu0 0.0
  %123 = vmatpush1.msra.mxu0 0.0
  %124 = vmatprep.subr.mxu0 0.0
  %125 = vmatpush1.msra.mxu0 0.0
  %126 = vmatprep.subr.mxu0 0.0
  %127 = vmatpush1.msra.mxu0 0.0
  %128 = vmatprep.subr.mxu0 0.0
  %129 = vmatpush1.msra.mxu0 0.0
  %130 = vmatprep.subr.mxu0 0.0
  %131 = vmatpush1.msra.mxu0 0.0
  %132 = vmatprep.subr.mxu0 0.0
  %133 = vmatpush1.msra.mxu0 0.0
  %134 = vmatprep.subr.mxu0 0.0
  %135 = vmatpush1.msra.mxu0 0.0
  %136 = vmatprep.subr.mxu0 0.0
  %137 = vmatpush1.msra.mxu0 0.0
  %138 = vmatprep.subr.mxu0 0.0
  %139 = vmatpush1.msra.mxu0 0.0
  %140 = vmatprep.subr.mxu0 0.0
  %141 = vmatpush1.msra.mxu0 0.0
  %142 = vmatprep.subr.mxu0 0.0
  %143 = vmatpush1.msra.mxu0 0.0
  %144 = vmatprep.subr.mxu0 0.0
  %145 = vmatpush1.msra.mxu0 0.0
  %146 = vmatprep.subr.mxu0 0.0
  %147 = vmatpush1.msra.mxu0 0.0
  %148 = vmatprep.subr.mxu0 0.0
  %149 = vmatpush1.msra.mxu0 0.0
  %150 = vmatprep.mubr.f32.mxu0 0.0
  %151 = vmatmul.mubr.f32.gmra.mrb[0].mxu0 %v59
  %v152 = vpop.f32.mrb[0].mxu0
  %v153 = vadd.f32 %v55, %v152
  %v154 = vpop.f32.mrb[0].mxu0
  %155 = vmatprep.mubr.f32.mxu0 0.0
  %156 = vmatmul.mubr.f32.gmra.mrb[0].mxu0 %v62
  %v157 = vpop.f32.mrb[0].mxu0
  %v158 = vadd.f32 %v55, %v157
  %v159 = vpop.f32.mrb[0].mxu0
  %160 = vmatprep.mubr.f32.mxu0 0.0
  %161 = vmatmul.mubr.f32.gmra.mrb[0].mxu0 %v65
  %v162 = vpop.f32.mrb[0].mxu0
  %v163 = vadd.f32 %v55, %v162
  %v164 = vpop.f32.mrb[0].mxu0
  %165 = vmatprep.mubr.f32.mxu0 0.0
  %166 = vmatmul.mubr.f32.gmra.mrb[0].mxu0 %v68
  %v167 = vpop.f32.mrb[0].mxu0
  %v168 = vadd.f32 %v55, %v167
  %v169 = vpop.f32.mrb[0].mxu0
  %170 = vmatprep.mubr.f32.mxu0 0.0
  %171 = vmatmul.mubr.f32.gmra.mrb[0].mxu0 %v71
  %v172 = vpop.f32.mrb[0].mxu0
  %v173 = vadd.f32 %v55, %v172
  %v174 = vpop.f32.mrb[0].mxu0
  %175 = vmatprep.mubr.f32.mxu0 0.0
  %176 = vmatmul.mubr.f32.gmra.mrb[0].mxu0 %v74
  %v177 = vpop.f32.mrb[0].mxu0
  %v178 = vadd.f32 %v55, %v177
  %v179 = vpop.f32.mrb[0].mxu0
  %180 = vmatprep.mubr.f32.mxu0 0.0
  %181 = vmatmul.mubr.f32.gmra.mrb[0].mxu0 %v77
  %v182 = vpop.f32.mrb[0].mxu0
  %v183 = vadd.f32 %v55, %v182
  %v184 = vpop.f32.mrb[0].mxu0
  %185 = vmatprep.mubr.f32.mxu0 0.0
  %186 = vmatmul.mubr.f32.gmra.mrb[0].mxu0 %v80
  %v187 = vpop.f32.mrb[0].mxu0
  %v188 = vadd.f32 %v55, %v187
  %v189 = vpop.f32.mrb[0].mxu0
  %190 = vdwg.mxu0
  %v191 = vld [vmem:[%s4] sm:$0xff]
  %v192 = vld [vmem:[%s4 + $0x8] sm:$0xff]
  %v193 = vld [vmem:[%s4 + $0x10] sm:$0xff]
  %v194 = vld [vmem:[%s4 + $0x18] sm:$0xff]
  %v195 = vld [vmem:[%s4 + $0x20] sm:$0xff]
  %v196 = vld [vmem:[%s4 + $0x28] sm:$0xff]
  %v197 = vld [vmem:[%s4 + $0x30] sm:$0xff]
  %v198 = vld [vmem:[%s4 + $0x38] sm:$0xff]
  %v199 = vld [vmem:[%s5] sm:$0x1]
  %v201 = vlaneseq
  %v202 = vshrl.u32 %v201, 7
  %v203 = vsub.s32 0, %v202
  %v204 = vrot.slane %v199, %v203
  %v206 = vxor.u32 %v153, 2147483648
  %v207 = vmul.f32 %v206, 1.442695
  %v208 = vpow.pop %v207
  %v209 = vadd.f32 %v208, 1.0
  %v210 = vrcp.pop %v209
  %v211 = vmul.f32 1.0, %v210
  %213 = vrot.lane.b32.xlu0 %v153, 32
  %v214 = vpop.permute.xlu0 %213
  %v216 = vmul.f32 %v211, %v214
  %218 = vrot.lane.b32.xlu0 %v216, 64
  %v219 = vpop.permute.xlu0 %218
  %v221 = vadd.f32 %v153, %v219
  %v222 = vtanh.pop %v221
  %v223 = vsub.f32 1.0, %v211
  %225 = vrot.lane.b32.xlu0 %v222, 96
  %v226 = vpop.permute.xlu0 %225
  %v228 = vmul.f32 %v223, %v226
  %230 = vrot.lane.b32.xlu0 %v228, 96
  %v231 = vpop.permute.xlu0 %230
  %vm232 = vcmask 261120
  %v233 = vsel %vm232, %v231, 0
  %235 = vmatprep.subr.mxu0 0.0
  %236 = vmatpush1.msra.mxu0 %v191
  %237 = vmatprep.subr.mxu0 0.0
  %238 = vmatpush1.msra.mxu0 %v192
  %239 = vmatprep.subr.mxu0 0.0
  %240 = vmatpush1.msra.mxu0 %v193
  %241 = vmatprep.subr.mxu0 0.0
  %242 = vmatpush1.msra.mxu0 %v194
  %243 = vmatprep.subr.mxu0 0.0
  %244 = vmatpush1.msra.mxu0 0.0
  %245 = vmatprep.subr.mxu0 0.0
  %246 = vmatpush1.msra.mxu0 0.0
  %247 = vmatprep.subr.mxu0 0.0
  %248 = vmatpush1.msra.mxu0 0.0
  %249 = vmatprep.subr.mxu0 0.0
  %250 = vmatpush1.msra.mxu0 0.0
  %251 = vmatprep.subr.mxu0 0.0
  %252 = vmatpush1.msra.mxu0 0.0
  %253 = vmatprep.subr.mxu0 0.0
  %254 = vmatpush1.msra.mxu0 0.0
  %255 = vmatprep.subr.mxu0 0.0
  %256 = vmatpush1.msra.mxu0 0.0
  %257 = vmatprep.subr.mxu0 0.0
  %258 = vmatpush1.msra.mxu0 0.0
  %259 = vmatprep.subr.mxu0 0.0
  %260 = vmatpush1.msra.mxu0 0.0
  %261 = vmatprep.subr.mxu0 0.0
  %262 = vmatpush1.msra.mxu0 0.0
  %263 = vmatprep.subr.mxu0 0.0
  %264 = vmatpush1.msra.mxu0 0.0
  %265 = vmatprep.subr.mxu0 0.0
  %266 = vmatpush1.msra.mxu0 0.0
  %267 = vmatprep.subr.mxu0 0.0
  %268 = vmatpush1.msra.mxu0 0.0
  %269 = vmatprep.subr.mxu0 0.0
  %270 = vmatpush1.msra.mxu0 0.0
  %271 = vmatprep.subr.mxu0 0.0
  %272 = vmatpush1.msra.mxu0 0.0
  %273 = vmatprep.subr.mxu0 0.0
  %274 = vmatpush1.msra.mxu0 0.0
  %275 = vmatprep.subr.mxu0 0.0
  %276 = vmatpush1.msra.mxu0 0.0
  %277 = vmatprep.subr.mxu0 0.0
  %278 = vmatpush1.msra.mxu0 0.0
  %279 = vmatprep.subr.mxu0 0.0
  %280 = vmatpush1.msra.mxu0 0.0
  %281 = vmatprep.subr.mxu0 0.0
  %282 = vmatpush1.msra.mxu0 0.0
  %283 = vmatprep.subr.mxu0 0.0
  %284 = vmatpush1.msra.mxu0 0.0
  %285 = vmatprep.subr.mxu0 0.0
  %286 = vmatpush1.msra.mxu0 0.0
  %287 = vmatprep.subr.mxu0 0.0
  %288 = vmatpush1.msra.mxu0 0.0
  %289 = vmatprep.subr.mxu0 0.0
  %290 = vmatpush1.msra.mxu0 0.0
  %291 = vmatprep.subr.mxu0 0.0
  %292 = vmatpush1.msra.mxu0 0.0
  %293 = vmatprep.subr.mxu0 0.0
  %294 = vmatpush1.msra.mxu0 0.0
  %295 = vmatprep.subr.mxu0 0.0
  %296 = vmatpush1.msra.mxu0 0.0
  %297 = vmatprep.subr.mxu0 0.0
  %298 = vmatpush1.msra.mxu0 0.0
  %299 = vmatprep.mubr.f32.mxu0 0.0
  %300 = vmatmul.mubr.f32.gmra.mrb[0].mxu0 %v233
  %v301 = vpop.f32.mrb[0].mxu0
  %v302 = vadd.f32 %v204, %v301
  %v303 = vpop.f32.mrb[0].mxu0
  %304 = vdwg.mxu0
  %v305 = vxor.u32 %v302, 2147483648
  %v306 = vmul.f32 %v305, 1.442695
  %v307 = vpow.pop %v306
  %v308 = vadd.f32 %v307, 1.0
  %v309 = vrcp.pop %v308
  %v310 = vmul.f32 1.0, %v309
  %312 = vrot.lane.b32.xlu0 %v302, 32
  %v313 = vpop.permute.xlu0 %312
  %v315 = vmul.f32 %v310, %v313
  %317 = vrot.lane.b32.xlu0 %v315, 64
  %v318 = vpop.permute.xlu0 %317
  %v320 = vadd.f32 %v302, %v318
  %v321 = vtanh.pop %v320
  %v322 = vsub.f32 1.0, %v310
  %324 = vrot.lane.b32.xlu0 %v321, 96
  %v325 = vpop.permute.xlu0 %324
  %v327 = vmul.f32 %v322, %v325
  %328 = vmatprep.subr.mxu0 0.0
  %329 = vmatpush1.msra.mxu0 %v38
  %330 = vmatprep.subr.mxu0 0.0
  %331 = vmatpush1.msra.mxu0 %v39
  %332 = vmatprep.subr.mxu0 0.0
  %333 = vmatpush1.msra.mxu0 %v40
  %334 = vmatprep.subr.mxu0 0.0
  %335 = vmatpush1.msra.mxu0 %v41
  %336 = vmatprep.subr.mxu0 0.0
  %337 = vmatpush1.msra.mxu0 0.0
  %338 = vmatprep.subr.mxu0 0.0
  %339 = vmatpush1.msra.mxu0 0.0
  %340 = vmatprep.subr.mxu0 0.0
  %341 = vmatpush1.msra.mxu0 0.0
  %342 = vmatprep.subr.mxu0 0.0
  %343 = vmatpush1.msra.mxu0 0.0
  %344 = vmatprep.subr.mxu0 0.0
  %345 = vmatpush1.msra.mxu0 0.0
  %346 = vmatprep.subr.mxu0 0.0
  %347 = vmatpush1.msra.mxu0 0.0
  %348 = vmatprep.subr.mxu0 0.0
  %349 = vmatpush1.msra.mxu0 0.0
  %350 = vmatprep.subr.mxu0 0.0
  %351 = vmatpush1.msra.mxu0 0.0
  %352 = vmatprep.subr.mxu0 0.0
  %353 = vmatpush1.msra.mxu0 0.0
  %354 = vmatprep.subr.mxu0 0.0
  %355 = vmatpush1.msra.mxu0 0.0
  %356 = vmatprep.subr.mxu0 0.0
  %357 = vmatpush1.msra.mxu0 0.0
  %358 = vmatprep.subr.mxu0 0.0
  %359 = vmatpush1.msra.mxu0 0.0
  %360 = vmatprep.subr.mxu0 0.0
  %361 = vmatpush1.msra.mxu0 0.0
  %362 = vmatprep.subr.mxu0 0.0
  %363 = vmatpush1.msra.mxu0 0.0
  %364 = vmatprep.subr.mxu0 0.0
  %365 = vmatpush1.msra.mxu0 0.0
  %366 = vmatprep.subr.mxu0 0.0
  %367 = vmatpush1.msra.mxu0 0.0
  %368 = vmatprep.subr.mxu0 0.0
  %369 = vmatpush1.msra.mxu0 0.0
  %370 = vmatprep.subr.mxu0 0.0
  %371 = vmatpush1.msra.mxu0 0.0
  %372 = vmatprep.subr.mxu0 0.0
  %373 = vmatpush1.msra.mxu0 0.0
  %374 = vmatprep.subr.mxu0 0.0
  %375 = vmatpush1.msra.mxu0 0.0
  %376 = vmatprep.subr.mxu0 0.0
  %377 = vmatpush1.msra.mxu0 0.0
  %378 = vmatprep.subr.mxu0 0.0
  %379 = vmatpush1.msra.mxu0 0.0
  %380 = vmatprep.subr.mxu0 0.0
  %381 = vmatpush1.msra.mxu0 0.0
  %382 = vmatprep.subr.mxu0 0.0
  %383 = vmatpush1.msra.mxu0 0.0
  %384 = vmatprep.subr.mxu0 0.0
  %385 = vmatpush1.msra.mxu0 0.0
  %386 = vmatprep.subr.mxu0 0.0
  %387 = vmatpush1.msra.mxu0 0.0
  %388 = vmatprep.subr.mxu0 0.0
  %389 = vmatpush1.msra.mxu0 0.0
  %390 = vmatprep.subr.mxu0 0.0
  %391 = vmatpush1.msra.mxu0 0.0
  %392 = vmatprep.mubr.f32.mxu0 0.0
  %393 = vmatmul.mubr.f32.gmra.mrb[0].mxu0 %v233
  %v394 = vpop.f32.mrb[0].mxu0
  %v395 = vadd.f32 0.0, %v394
  %v396 = vpop.f32.mrb[0].mxu0
  %397 = vdwg.mxu0
  %v398 = vadd.f32 %v158, %v395
  %v399 = vxor.u32 %v398, 2147483648
  %v400 = vmul.f32 %v399, 1.442695
  %v401 = vpow.pop %v400
  %v402 = vadd.f32 %v401, 1.0
  %v403 = vrcp.pop %v402
  %v404 = vmul.f32 1.0, %v403
  %406 = vrot.lane.b32.xlu0 %v398, 32
  %v407 = vpop.permute.xlu0 %406
  %v409 = vmul.f32 %v404, %v407
  %411 = vrot.lane.b32.xlu0 %v409, 64
  %v412 = vpop.permute.xlu0 %411
  %v414 = vadd.f32 %v398, %v412
  %v415 = vtanh.pop %v414
  %v416 = vsub.f32 1.0, %v404
  %418 = vrot.lane.b32.xlu0 %v415, 96
  %v419 = vpop.permute.xlu0 %418
  %v421 = vmul.f32 %v416, %v419
  %v422 = vmul.f32 %v404, %v228
  %v423 = vadd.f32 %v421, %v422
  %425 = vrot.lane.b32.xlu0 %v423, 96
  %v426 = vpop.permute.xlu0 %425
  %v428 = vsel %vm232, %v426, %v327
  %vm429 = vcmask 523264
  %v431 = vsel %vm429, %v428, 0
  %433 = vmatprep.subr.mxu0 0.0
  %434 = vmatpush1.msra.mxu0 %v191
  %435 = vmatprep.subr.mxu0 0.0
  %436 = vmatpush1.msra.mxu0 %v192
  %437 = vmatprep.subr.mxu0 0.0
  %438 = vmatpush1.msra.mxu0 %v193
  %439 = vmatprep.subr.mxu0 0.0
  %440 = vmatpush1.msra.mxu0 %v194
  %441 = vmatprep.subr.mxu0 0.0
  %442 = vmatpush1.msra.mxu0 %v195
  %443 = vmatprep.subr.mxu0 0.0
  %444 = vmatpush1.msra.mxu0 %v196
  %445 = vmatprep.subr.mxu0 0.0
  %446 = vmatpush1.msra.mxu0 %v197
  %447 = vmatprep.subr.mxu0 0.0
  %448 = vmatpush1.msra.mxu0 %v198
  %449 = vmatprep.subr.mxu0 0.0
  %450 = vmatpush1.msra.mxu0 0.0
  %451 = vmatprep.subr.mxu0 0.0
  %452 = vmatpush1.msra.mxu0 0.0
  %453 = vmatprep.subr.mxu0 0.0
  %454 = vmatpush1.msra.mxu0 0.0
  %455 = vmatprep.subr.mxu0 0.0
  %456 = vmatpush1.msra.mxu0 0.0
  %457 = vmatprep.subr.mxu0 0.0
  %458 = vmatpush1.msra.mxu0 0.0
  %459 = vmatprep.subr.mxu0 0.0
  %460 = vmatpush1.msra.mxu0 0.0
  %461 = vmatprep.subr.mxu0 0.0
  %462 = vmatpush1.msra.mxu0 0.0
  %463 = vmatprep.subr.mxu0 0.0
  %464 = vmatpush1.msra.mxu0 0.0
  %465 = vmatprep.subr.mxu0 0.0
  %466 = vmatpush1.msra.mxu0 0.0
  %467 = vmatprep.subr.mxu0 0.0
  %468 = vmatpush1.msra.mxu0 0.0
  %469 = vmatprep.subr.mxu0 0.0
  %470 = vmatpush1.msra.mxu0 0.0
  %471 = vmatprep.subr.mxu0 0.0
  %472 = vmatpush1.msra.mxu0 0.0
  %473 = vmatprep.subr.mxu0 0.0
  %474 = vmatpush1.msra.mxu0 0.0
  %475 = vmatprep.subr.mxu0 0.0
  %476 = vmatpush1.msra.mxu0 0.0
  %477 = vmatprep.subr.mxu0 0.0
  %478 = vmatpush1.msra.mxu0 0.0
  %479 = vmatprep.subr.mxu0 0.0
  %480 = vmatpush1.msra.mxu0 0.0
  %481 = vmatprep.subr.mxu0 0.0
  %482 = vmatpush1.msra.mxu0 0.0
  %483 = vmatprep.subr.mxu0 0.0
  %484 = vmatpush1.msra.mxu0 0.0
  %485 = vmatprep.subr.mxu0 0.0
  %486 = vmatpush1.msra.mxu0 0.0
  %487 = vmatprep.subr.mxu0 0.0
  %488 = vmatpush1.msra.mxu0 0.0
  %489 = vmatprep.subr.mxu0 0.0
  %490 = vmatpush1.msra.mxu0 0.0
  %491 = vmatprep.subr.mxu0 0.0
  %492 = vmatpush1.msra.mxu0 0.0
  %493 = vmatprep.subr.mxu0 0.0
  %494 = vmatpush1.msra.mxu0 0.0
  %495 = vmatprep.subr.mxu0 0.0
  %496 = vmatpush1.msra.mxu0 0.0
  %497 = vmatprep.mubr.f32.mxu0 0.0
  %498 = vmatmul.mubr.f32.gmra.mrb[0].mxu0 %v431
  %v499 = vpop.f32.mrb[0].mxu0
  %v500 = vadd.f32 %v204, %v499
  %v501 = vpop.f32.mrb[0].mxu0
  %502 = vdwg.mxu0
  %v503 = vxor.u32 %v500, 2147483648
  %v504 = vmul.f32 %v503, 1.442695
  %v505 = vpow.pop %v504
  %v506 = vadd.f32 %v505, 1.0
  %v507 = vrcp.pop %v506
  %v508 = vmul.f32 1.0, %v507
  %510 = vrot.lane.b32.xlu0 %v500, 32
  %v511 = vpop.permute.xlu0 %510
  %v513 = vmul.f32 %v508, %v511
  %515 = vrot.lane.b32.xlu0 %v513, 64
  %v516 = vpop.permute.xlu0 %515
  %v518 = vadd.f32 %v500, %v516
  %v519 = vtanh.pop %v518
  %v520 = vsub.f32 1.0, %v508
  %522 = vrot.lane.b32.xlu0 %v519, 96
  %v523 = vpop.permute.xlu0 %522
  %v525 = vmul.f32 %v520, %v523
  %v526 = vmul.f32 %v508, %v327
  %v527 = vadd.f32 %v525, %v526
  %v528 = vsel %vm232, %v426, 0
  %530 = vmatprep.subr.mxu0 0.0
  %531 = vmatpush1.msra.mxu0 %v38
  %532 = vmatprep.subr.mxu0 0.0
  %533 = vmatpush1.msra.mxu0 %v39
  %534 = vmatprep.subr.mxu0 0.0
  %535 = vmatpush1.msra.mxu0 %v40
  %536 = vmatprep.subr.mxu0 0.0
  %537 = vmatpush1.msra.mxu0 %v41
  %538 = vmatprep.subr.mxu0 0.0
  %539 = vmatpush1.msra.mxu0 0.0
  %540 = vmatprep.subr.mxu0 0.0
  %541 = vmatpush1.msra.mxu0 0.0
  %542 = vmatprep.subr.mxu0 0.0
  %543 = vmatpush1.msra.mxu0 0.0
  %544 = vmatprep.subr.mxu0 0.0
  %545 = vmatpush1.msra.mxu0 0.0
  %546 = vmatprep.subr.mxu0 0.0
  %547 = vmatpush1.msra.mxu0 0.0
  %548 = vmatprep.subr.mxu0 0.0
  %549 = vmatpush1.msra.mxu0 0.0
  %550 = vmatprep.subr.mxu0 0.0
  %551 = vmatpush1.msra.mxu0 0.0
  %552 = vmatprep.subr.mxu0 0.0
  %553 = vmatpush1.msra.mxu0 0.0
  %554 = vmatprep.subr.mxu0 0.0
  %555 = vmatpush1.msra.mxu0 0.0
  %556 = vmatprep.subr.mxu0 0.0
  %557 = vmatpush1.msra.mxu0 0.0
  %558 = vmatprep.subr.mxu0 0.0
  %559 = vmatpush1.msra.mxu0 0.0
  %560 = vmatprep.subr.mxu0 0.0
  %561 = vmatpush1.msra.mxu0 0.0
  %562 = vmatprep.subr.mxu0 0.0
  %563 = vmatpush1.msra.mxu0 0.0
  %564 = vmatprep.subr.mxu0 0.0
  %565 = vmatpush1.msra.mxu0 0.0
  %566 = vmatprep.subr.mxu0 0.0
  %567 = vmatpush1.msra.mxu0 0.0
  %568 = vmatprep.subr.mxu0 0.0
  %569 = vmatpush1.msra.mxu0 0.0
  %570 = vmatprep.subr.mxu0 0.0
  %571 = vmatpush1.msra.mxu0 0.0
  %572 = vmatprep.subr.mxu0 0.0
  %573 = vmatpush1.msra.mxu0 0.0
  %574 = vmatprep.subr.mxu0 0.0
  %575 = vmatpush1.msra.mxu0 0.0
  %576 = vmatprep.subr.mxu0 0.0
  %577 = vmatpush1.msra.mxu0 0.0
  %578 = vmatprep.subr.mxu0 0.0
  %579 = vmatpush1.msra.mxu0 0.0
  %580 = vmatprep.subr.mxu0 0.0
  %581 = vmatpush1.msra.mxu0 0.0
  %582 = vmatprep.subr.mxu0 0.0
  %583 = vmatpush1.msra.mxu0 0.0
  %584 = vmatprep.subr.mxu0 0.0
  %585 = vmatpush1.msra.mxu0 0.0
  %586 = vmatprep.subr.mxu0 0.0
  %587 = vmatpush1.msra.mxu0 0.0
  %588 = vmatprep.subr.mxu0 0.0
  %589 = vmatpush1.msra.mxu0 0.0
  %590 = vmatprep.subr.mxu0 0.0
  %591 = vmatpush1.msra.mxu0 0.0
  %592 = vmatprep.subr.mxu0 0.0
  %593 = vmatpush1.msra.mxu0 0.0
  %594 = vmatprep.mubr.f32.mxu0 0.0
  %595 = vmatmul.mubr.f32.gmra.mrb[0].mxu0 %v528
  %v596 = vpop.f32.mrb[0].mxu0
  %v597 = vadd.f32 0.0, %v596
  %v598 = vpop.f32.mrb[0].mxu0
  %599 = vdwg.mxu0
  %v600 = vadd.f32 %v163, %v597
  %v601 = vxor.u32 %v600, 2147483648
  %v602 = vmul.f32 %v601, 1.442695
  %v603 = vpow.pop %v602
  %v604 = vadd.f32 %v603, 1.0
  %v605 = vrcp.pop %v604
  %v606 = vmul.f32 1.0, %v605
  %608 = vrot.lane.b32.xlu0 %v600, 32
  %v609 = vpop.permute.xlu0 %608
  %v611 = vmul.f32 %v606, %v609
  %613 = vrot.lane.b32.xlu0 %v611, 64
  %v614 = vpop.permute.xlu0 %613
  %v616 = vadd.f32 %v600, %v614
  %v617 = vtanh.pop %v616
  %v618 = vsub.f32 1.0, %v606
  %620 = vrot.lane.b32.xlu0 %v617, 96
  %v621 = vpop.permute.xlu0 %620
  %v623 = vmul.f32 %v618, %v621
  %v624 = vmul.f32 %v606, %v423
  %v625 = vadd.f32 %v623, %v624
  %627 = vrot.lane.b32.xlu0 %v625, 96
  %v628 = vpop.permute.xlu0 %627
  %v630 = vsel %vm232, %v628, %v527
  %v632 = vsel %vm429, %v630, 0
  %634 = vmatprep.subr.mxu0 0.0
  %635 = vmatpush1.msra.mxu0 %v191
  %636 = vmatprep.subr.mxu0 0.0
  %637 = vmatpush1.msra.mxu0 %v192
  %638 = vmatprep.subr.mxu0 0.0
  %639 = vmatpush1.msra.mxu0 %v193
  %640 = vmatprep.subr.mxu0 0.0
  %641 = vmatpush1.msra.mxu0 %v194
  %642 = vmatprep.subr.mxu0 0.0
  %643 = vmatpush1.msra.mxu0 %v195
  %644 = vmatprep.subr.mxu0 0.0
  %645 = vmatpush1.msra.mxu0 %v196
  %646 = vmatprep.subr.mxu0 0.0
  %647 = vmatpush1.msra.mxu0 %v197
  %648 = vmatprep.subr.mxu0 0.0
  %649 = vmatpush1.msra.mxu0 %v198
  %650 = vmatprep.subr.mxu0 0.0
  %651 = vmatpush1.msra.mxu0 0.0
  %652 = vmatprep.subr.mxu0 0.0
  %653 = vmatpush1.msra.mxu0 0.0
  %654 = vmatprep.subr.mxu0 0.0
  %655 = vmatpush1.msra.mxu0 0.0
  %656 = vmatprep.subr.mxu0 0.0
  %657 = vmatpush1.msra.mxu0 0.0
  %658 = vmatprep.subr.mxu0 0.0
  %659 = vmatpush1.msra.mxu0 0.0
  %660 = vmatprep.subr.mxu0 0.0
  %661 = vmatpush1.msra.mxu0 0.0
  %662 = vmatprep.subr.mxu0 0.0
  %663 = vmatpush1.msra.mxu0 0.0
  %664 = vmatprep.subr.mxu0 0.0
  %665 = vmatpush1.msra.mxu0 0.0
  %666 = vmatprep.subr.mxu0 0.0
  %667 = vmatpush1.msra.mxu0 0.0
  %668 = vmatprep.subr.mxu0 0.0
  %669 = vmatpush1.msra.mxu0 0.0
  %670 = vmatprep.subr.mxu0 0.0
  %671 = vmatpush1.msra.mxu0 0.0
  %672 = vmatprep.subr.mxu0 0.0
  %673 = vmatpush1.msra.mxu0 0.0
  %674 = vmatprep.subr.mxu0 0.0
  %675 = vmatpush1.msra.mxu0 0.0
  %676 = vmatprep.subr.mxu0 0.0
  %677 = vmatpush1.msra.mxu0 0.0
  %678 = vmatprep.subr.mxu0 0.0
  %679 = vmatpush1.msra.mxu0 0.0
  %680 = vmatprep.subr.mxu0 0.0
  %681 = vmatpush1.msra.mxu0 0.0
  %682 = vmatprep.subr.mxu0 0.0
  %683 = vmatpush1.msra.mxu0 0.0
  %684 = vmatprep.subr.mxu0 0.0
  %685 = vmatpush1.msra.mxu0 0.0
  %686 = vmatprep.subr.mxu0 0.0
  %687 = vmatpush1.msra.mxu0 0.0
  %688 = vmatprep.subr.mxu0 0.0
  %689 = vmatpush1.msra.mxu0 0.0
  %690 = vmatprep.subr.mxu0 0.0
  %691 = vmatpush1.msra.mxu0 0.0
  %692 = vmatprep.subr.mxu0 0.0
  %693 = vmatpush1.msra.mxu0 0.0
  %694 = vmatprep.subr.mxu0 0.0
  %695 = vmatpush1.msra.mxu0 0.0
  %696 = vmatprep.subr.mxu0 0.0
  %697 = vmatpush1.msra.mxu0 0.0
  %698 = vmatprep.mubr.f32.mxu0 0.0
  %699 = vmatmul.mubr.f32.gmra.mrb[0].mxu0 %v632
  %v700 = vpop.f32.mrb[0].mxu0
  %v701 = vadd.f32 %v204, %v700
  %v702 = vpop.f32.mrb[0].mxu0
  %703 = vdwg.mxu0
  %v704 = vxor.u32 %v701, 2147483648
  %v705 = vmul.f32 %v704, 1.442695
  %v706 = vpow.pop %v705
  %v707 = vadd.f32 %v706, 1.0
  %v708 = vrcp.pop %v707
  %v709 = vmul.f32 1.0, %v708
  %711 = vrot.lane.b32.xlu0 %v701, 32
  %v712 = vpop.permute.xlu0 %711
  %v714 = vmul.f32 %v709, %v712
  %716 = vrot.lane.b32.xlu0 %v714, 64
  %v717 = vpop.permute.xlu0 %716
  %v719 = vadd.f32 %v701, %v717
  %v720 = vtanh.pop %v719
  %v721 = vsub.f32 1.0, %v709
  %723 = vrot.lane.b32.xlu0 %v720, 96
  %v724 = vpop.permute.xlu0 %723
  %v726 = vmul.f32 %v721, %v724
  %v727 = vmul.f32 %v709, %v527
  %v728 = vadd.f32 %v726, %v727
  %v729 = vsel %vm232, %v628, 0
  %731 = vmatprep.subr.mxu0 0.0
  %732 = vmatpush1.msra.mxu0 %v38
  %733 = vmatprep.subr.mxu0 0.0
  %734 = vmatpush1.msra.mxu0 %v39
  %735 = vmatprep.subr.mxu0 0.0
  %736 = vmatpush1.msra.mxu0 %v40
  %737 = vmatprep.subr.mxu0 0.0
  %738 = vmatpush1.msra.mxu0 %v41
  %739 = vmatprep.subr.mxu0 0.0
  %740 = vmatpush1.msra.mxu0 0.0
  %741 = vmatprep.subr.mxu0 0.0
  %742 = vmatpush1.msra.mxu0 0.0
  %743 = vmatprep.subr.mxu0 0.0
  %744 = vmatpush1.msra.mxu0 0.0
  %745 = vmatprep.subr.mxu0 0.0
  %746 = vmatpush1.msra.mxu0 0.0
  %747 = vmatprep.subr.mxu0 0.0
  %748 = vmatpush1.msra.mxu0 0.0
  %749 = vmatprep.subr.mxu0 0.0
  %750 = vmatpush1.msra.mxu0 0.0
  %751 = vmatprep.subr.mxu0 0.0
  %752 = vmatpush1.msra.mxu0 0.0
  %753 = vmatprep.subr.mxu0 0.0
  %754 = vmatpush1.msra.mxu0 0.0
  %755 = vmatprep.subr.mxu0 0.0
  %756 = vmatpush1.msra.mxu0 0.0
  %757 = vmatprep.subr.mxu0 0.0
  %758 = vmatpush1.msra.mxu0 0.0
  %759 = vmatprep.subr.mxu0 0.0
  %760 = vmatpush1.msra.mxu0 0.0
  %761 = vmatprep.subr.mxu0 0.0
  %762 = vmatpush1.msra.mxu0 0.0
  %763 = vmatprep.subr.mxu0 0.0
  %764 = vmatpush1.msra.mxu0 0.0
  %765 = vmatprep.subr.mxu0 0.0
  %766 = vmatpush1.msra.mxu0 0.0
  %767 = vmatprep.subr.mxu0 0.0
  %768 = vmatpush1.msra.mxu0 0.0
  %769 = vmatprep.subr.mxu0 0.0
  %770 = vmatpush1.msra.mxu0 0.0
  %771 = vmatprep.subr.mxu0 0.0
  %772 = vmatpush1.msra.mxu0 0.0
  %773 = vmatprep.subr.mxu0 0.0
  %774 = vmatpush1.msra.mxu0 0.0
  %775 = vmatprep.subr.mxu0 0.0
  %776 = vmatpush1.msra.mxu0 0.0
  %777 = vmatprep.subr.mxu0 0.0
  %778 = vmatpush1.msra.mxu0 0.0
  %779 = vmatprep.subr.mxu0 0.0
  %780 = vmatpush1.msra.mxu0 0.0
  %781 = vmatprep.subr.mxu0 0.0
  %782 = vmatpush1.msra.mxu0 0.0
  %783 = vmatprep.subr.mxu0 0.0
  %784 = vmatpush1.msra.mxu0 0.0
  %785 = vmatprep.subr.mxu0 0.0
  %786 = vmatpush1.msra.mxu0 0.0
  %787 = vmatprep.subr.mxu0 0.0
  %788 = vmatpush1.msra.mxu0 0.0
  %789 = vmatprep.subr.mxu0 0.0
  %790 = vmatpush1.msra.mxu0 0.0
  %791 = vmatprep.subr.mxu0 0.0
  %792 = vmatpush1.msra.mxu0 0.0
  %793 = vmatprep.subr.mxu0 0.0
  %794 = vmatpush1.msra.mxu0 0.0
  %795 = vmatprep.mubr.f32.mxu0 0.0
  %796 = vmatmul.mubr.f32.gmra.mrb[0].mxu0 %v729
  %v797 = vpop.f32.mrb[0].mxu0
  %v798 = vadd.f32 0.0, %v797
  %v799 = vpop.f32.mrb[0].mxu0
  %800 = vdwg.mxu0
  %v801 = vadd.f32 %v168, %v798
  %v802 = vxor.u32 %v801, 2147483648
  %v803 = vmul.f32 %v802, 1.442695
  %v804 = vpow.pop %v803
  %v805 = vadd.f32 %v804, 1.0
  %v806 = vrcp.pop %v805
  %v807 = vmul.f32 1.0, %v806
  %809 = vrot.lane.b32.xlu0 %v801, 32
  %v810 = vpop.permute.xlu0 %809
  %v812 = vmul.f32 %v807, %v810
  %814 = vrot.lane.b32.xlu0 %v812, 64
  %v815 = vpop.permute.xlu0 %814
  %v817 = vadd.f32 %v801, %v815
  %v818 = vtanh.pop %v817
  %v819 = vsub.f32 1.0, %v807
  %821 = vrot.lane.b32.xlu0 %v818, 96
  %v822 = vpop.permute.xlu0 %821
  %v824 = vmul.f32 %v819, %v822
  %v825 = vmul.f32 %v807, %v625
  %v826 = vadd.f32 %v824, %v825
  %828 = vrot.lane.b32.xlu0 %v826, 96
  %v829 = vpop.permute.xlu0 %828
  %v831 = vsel %vm232, %v829, %v728
  %v833 = vsel %vm429, %v831, 0
  %835 = vmatprep.subr.mxu0 0.0
  %836 = vmatpush1.msra.mxu0 %v191
  %837 = vmatprep.subr.mxu0 0.0
  %838 = vmatpush1.msra.mxu0 %v192
  %839 = vmatprep.subr.mxu0 0.0
  %840 = vmatpush1.msra.mxu0 %v193
  %841 = vmatprep.subr.mxu0 0.0
  %842 = vmatpush1.msra.mxu0 %v194
  %843 = vmatprep.subr.mxu0 0.0
  %844 = vmatpush1.msra.mxu0 %v195
  %845 = vmatprep.subr.mxu0 0.0
  %846 = vmatpush1.msra.mxu0 %v196
  %847 = vmatprep.subr.mxu0 0.0
  %848 = vmatpush1.msra.mxu0 %v197
  %849 = vmatprep.subr.mxu0 0.0
  %850 = vmatpush1.msra.mxu0 %v198
  %851 = vmatprep.subr.mxu0 0.0
  %852 = vmatpush1.msra.mxu0 0.0
  %853 = vmatprep.subr.mxu0 0.0
  %854 = vmatpush1.msra.mxu0 0.0
  %855 = vmatprep.subr.mxu0 0.0
  %856 = vmatpush1.msra.mxu0 0.0
  %857 = vmatprep.subr.mxu0 0.0
  %858 = vmatpush1.msra.mxu0 0.0
  %859 = vmatprep.subr.mxu0 0.0
  %860 = vmatpush1.msra.mxu0 0.0
  %861 = vmatprep.subr.mxu0 0.0
  %862 = vmatpush1.msra.mxu0 0.0
  %863 = vmatprep.subr.mxu0 0.0
  %864 = vmatpush1.msra.mxu0 0.0
  %865 = vmatprep.subr.mxu0 0.0
  %866 = vmatpush1.msra.mxu0 0.0
  %867 = vmatprep.subr.mxu0 0.0
  %868 = vmatpush1.msra.mxu0 0.0
  %869 = vmatprep.subr.mxu0 0.0
  %870 = vmatpush1.msra.mxu0 0.0
  %871 = vmatprep.subr.mxu0 0.0
  %872 = vmatpush1.msra.mxu0 0.0
  %873 = vmatprep.subr.mxu0 0.0
  %874 = vmatpush1.msra.mxu0 0.0
  %875 = vmatprep.subr.mxu0 0.0
  %876 = vmatpush1.msra.mxu0 0.0
  %877 = vmatprep.subr.mxu0 0.0
  %878 = vmatpush1.msra.mxu0 0.0
  %879 = vmatprep.subr.mxu0 0.0
  %880 = vmatpush1.msra.mxu0 0.0
  %881 = vmatprep.subr.mxu0 0.0
  %882 = vmatpush1.msra.mxu0 0.0
  %883 = vmatprep.subr.mxu0 0.0
  %884 = vmatpush1.msra.mxu0 0.0
  %885 = vmatprep.subr.mxu0 0.0
  %886 = vmatpush1.msra.mxu0 0.0
  %887 = vmatprep.subr.mxu0 0.0
  %888 = vmatpush1.msra.mxu0 0.0
  %889 = vmatprep.subr.mxu0 0.0
  %890 = vmatpush1.msra.mxu0 0.0
  %891 = vmatprep.subr.mxu0 0.0
  %892 = vmatpush1.msra.mxu0 0.0
  %893 = vmatprep.subr.mxu0 0.0
  %894 = vmatpush1.msra.mxu0 0.0
  %895 = vmatprep.subr.mxu0 0.0
  %896 = vmatpush1.msra.mxu0 0.0
  %897 = vmatprep.subr.mxu0 0.0
  %898 = vmatpush1.msra.mxu0 0.0
  %899 = vmatprep.mubr.f32.mxu0 0.0
  %900 = vmatmul.mubr.f32.gmra.mrb[0].mxu0 %v833
  %v901 = vpop.f32.mrb[0].mxu0
  %v902 = vadd.f32 %v204, %v901
  %v903 = vpop.f32.mrb[0].mxu0
  %904 = vdwg.mxu0
  %v905 = vxor.u32 %v902, 2147483648
  %v906 = vmul.f32 %v905, 1.442695
  %v907 = vpow.pop %v906
  %v908 = vadd.f32 %v907, 1.0
  %v909 = vrcp.pop %v908
  %v910 = vmul.f32 1.0, %v909
  %912 = vrot.lane.b32.xlu0 %v902, 32
  %v913 = vpop.permute.xlu0 %912
  %v915 = vmul.f32 %v910, %v913
  %917 = vrot.lane.b32.xlu0 %v915, 64
  %v918 = vpop.permute.xlu0 %917
  %v920 = vadd.f32 %v902, %v918
  %v921 = vtanh.pop %v920
  %v922 = vsub.f32 1.0, %v910
  %924 = vrot.lane.b32.xlu0 %v921, 96
  %v925 = vpop.permute.xlu0 %924
  %v927 = vmul.f32 %v922, %v925
  %v928 = vmul.f32 %v910, %v728
  %v929 = vadd.f32 %v927, %v928
  %v930 = vsel %vm232, %v829, 0
  %932 = vmatprep.subr.mxu0 0.0
  %933 = vmatpush1.msra.mxu0 %v38
  %934 = vmatprep.subr.mxu0 0.0
  %935 = vmatpush1.msra.mxu0 %v39
  %936 = vmatprep.subr.mxu0 0.0
  %937 = vmatpush1.msra.mxu0 %v40
  %938 = vmatprep.subr.mxu0 0.0
  %939 = vmatpush1.msra.mxu0 %v41
  %940 = vmatprep.subr.mxu0 0.0
  %941 = vmatpush1.msra.mxu0 0.0
  %942 = vmatprep.subr.mxu0 0.0
  %943 = vmatpush1.msra.mxu0 0.0
  %944 = vmatprep.subr.mxu0 0.0
  %945 = vmatpush1.msra.mxu0 0.0
  %946 = vmatprep.subr.mxu0 0.0
  %947 = vmatpush1.msra.mxu0 0.0
  %948 = vmatprep.subr.mxu0 0.0
  %949 = vmatpush1.msra.mxu0 0.0
  %950 = vmatprep.subr.mxu0 0.0
  %951 = vmatpush1.msra.mxu0 0.0
  %952 = vmatprep.subr.mxu0 0.0
  %953 = vmatpush1.msra.mxu0 0.0
  %954 = vmatprep.subr.mxu0 0.0
  %955 = vmatpush1.msra.mxu0 0.0
  %956 = vmatprep.subr.mxu0 0.0
  %957 = vmatpush1.msra.mxu0 0.0
  %958 = vmatprep.subr.mxu0 0.0
  %959 = vmatpush1.msra.mxu0 0.0
  %960 = vmatprep.subr.mxu0 0.0
  %961 = vmatpush1.msra.mxu0 0.0
  %962 = vmatprep.subr.mxu0 0.0
  %963 = vmatpush1.msra.mxu0 0.0
  %964 = vmatprep.subr.mxu0 0.0
  %965 = vmatpush1.msra.mxu0 0.0
  %966 = vmatprep.subr.mxu0 0.0
  %967 = vmatpush1.msra.mxu0 0.0
  %968 = vmatprep.subr.mxu0 0.0
  %969 = vmatpush1.msra.mxu0 0.0
  %970 = vmatprep.subr.mxu0 0.0
  %971 = vmatpush1.msra.mxu0 0.0
  %972 = vmatprep.subr.mxu0 0.0
  %973 = vmatpush1.msra.mxu0 0.0
  %974 = vmatprep.subr.mxu0 0.0
  %975 = vmatpush1.msra.mxu0 0.0
  %976 = vmatprep.subr.mxu0 0.0
  %977 = vmatpush1.msra.mxu0 0.0
  %978 = vmatprep.subr.mxu0 0.0
  %979 = vmatpush1.msra.mxu0 0.0
  %980 = vmatprep.subr.mxu0 0.0
  %981 = vmatpush1.msra.mxu0 0.0
  %982 = vmatprep.subr.mxu0 0.0
  %983 = vmatpush1.msra.mxu0 0.0
  %984 = vmatprep.subr.mxu0 0.0
  %985 = vmatpush1.msra.mxu0 0.0
  %986 = vmatprep.subr.mxu0 0.0
  %987 = vmatpush1.msra.mxu0 0.0
  %988 = vmatprep.subr.mxu0 0.0
  %989 = vmatpush1.msra.mxu0 0.0
  %990 = vmatprep.subr.mxu0 0.0
  %991 = vmatpush1.msra.mxu0 0.0
  %992 = vmatprep.subr.mxu0 0.0
  %993 = vmatpush1.msra.mxu0 0.0
  %994 = vmatprep.subr.mxu0 0.0
  %995 = vmatpush1.msra.mxu0 0.0
  %996 = vmatprep.mubr.f32.mxu0 0.0
  %997 = vmatmul.mubr.f32.gmra.mrb[0].mxu0 %v930
  %v998 = vpop.f32.mrb[0].mxu0
  %v999 = vadd.f32 0.0, %v998
  %v1000 = vpop.f32.mrb[0].mxu0
  %1001 = vdwg.mxu0
  %v1002 = vadd.f32 %v173, %v999
  %v1003 = vxor.u32 %v1002, 2147483648
  %v1004 = vmul.f32 %v1003, 1.442695
  %v1005 = vpow.pop %v1004
  %v1006 = vadd.f32 %v1005, 1.0
  %v1007 = vrcp.pop %v1006
  %v1008 = vmul.f32 1.0, %v1007
  %1010 = vrot.lane.b32.xlu0 %v1002, 32
  %v1011 = vpop.permute.xlu0 %1010
  %v1013 = vmul.f32 %v1008, %v1011
  %1015 = vrot.lane.b32.xlu0 %v1013, 64
  %v1016 = vpop.permute.xlu0 %1015
  %v1018 = vadd.f32 %v1002, %v1016
  %v1019 = vtanh.pop %v1018
  %v1020 = vsub.f32 1.0, %v1008
  %1022 = vrot.lane.b32.xlu0 %v1019, 96
  %v1023 = vpop.permute.xlu0 %1022
  %v1025 = vmul.f32 %v1020, %v1023
  %v1026 = vmul.f32 %v1008, %v826
  %v1027 = vadd.f32 %v1025, %v1026
  %1029 = vrot.lane.b32.xlu0 %v1027, 96
  %v1030 = vpop.permute.xlu0 %1029
  %v1032 = vsel %vm232, %v1030, %v929
  %v1034 = vsel %vm429, %v1032, 0
  %1036 = vmatprep.subr.mxu0 0.0
  %1037 = vmatpush1.msra.mxu0 %v191
  %1038 = vmatprep.subr.mxu0 0.0
  %1039 = vmatpush1.msra.mxu0 %v192
  %1040 = vmatprep.subr.mxu0 0.0
  %1041 = vmatpush1.msra.mxu0 %v193
  %1042 = vmatprep.subr.mxu0 0.0
  %1043 = vmatpush1.msra.mxu0 %v194
  %1044 = vmatprep.subr.mxu0 0.0
  %1045 = vmatpush1.msra.mxu0 %v195
  %1046 = vmatprep.subr.mxu0 0.0
  %1047 = vmatpush1.msra.mxu0 %v196
  %1048 = vmatprep.subr.mxu0 0.0
  %1049 = vmatpush1.msra.mxu0 %v197
  %1050 = vmatprep.subr.mxu0 0.0
  %1051 = vmatpush1.msra.mxu0 %v198
  %1052 = vmatprep.subr.mxu0 0.0
  %1053 = vmatpush1.msra.mxu0 0.0
  %1054 = vmatprep.subr.mxu0 0.0
  %1055 = vmatpush1.msra.mxu0 0.0
  %1056 = vmatprep.subr.mxu0 0.0
  %1057 = vmatpush1.msra.mxu0 0.0
  %1058 = vmatprep.subr.mxu0 0.0
  %1059 = vmatpush1.msra.mxu0 0.0
  %1060 = vmatprep.subr.mxu0 0.0
  %1061 = vmatpush1.msra.mxu0 0.0
  %1062 = vmatprep.subr.mxu0 0.0
  %1063 = vmatpush1.msra.mxu0 0.0
  %1064 = vmatprep.subr.mxu0 0.0
  %1065 = vmatpush1.msra.mxu0 0.0
  %1066 = vmatprep.subr.mxu0 0.0
  %1067 = vmatpush1.msra.mxu0 0.0
  %1068 = vmatprep.subr.mxu0 0.0
  %1069 = vmatpush1.msra.mxu0 0.0
  %1070 = vmatprep.subr.mxu0 0.0
  %1071 = vmatpush1.msra.mxu0 0.0
  %1072 = vmatprep.subr.mxu0 0.0
  %1073 = vmatpush1.msra.mxu0 0.0
  %1074 = vmatprep.subr.mxu0 0.0
  %1075 = vmatpush1.msra.mxu0 0.0
  %1076 = vmatprep.subr.mxu0 0.0
  %1077 = vmatpush1.msra.mxu0 0.0
  %1078 = vmatprep.subr.mxu0 0.0
  %1079 = vmatpush1.msra.mxu0 0.0
  %1080 = vmatprep.subr.mxu0 0.0
  %1081 = vmatpush1.msra.mxu0 0.0
  %1082 = vmatprep.subr.mxu0 0.0
  %1083 = vmatpush1.msra.mxu0 0.0
  %1084 = vmatprep.subr.mxu0 0.0
  %1085 = vmatpush1.msra.mxu0 0.0
  %1086 = vmatprep.subr.mxu0 0.0
  %1087 = vmatpush1.msra.mxu0 0.0
  %1088 = vmatprep.subr.mxu0 0.0
  %1089 = vmatpush1.msra.mxu0 0.0
  %1090 = vmatprep.subr.mxu0 0.0
  %1091 = vmatpush1.msra.mxu0 0.0
  %1092 = vmatprep.subr.mxu0 0.0
  %1093 = vmatpush1.msra.mxu0 0.0
  %1094 = vmatprep.subr.mxu0 0.0
  %1095 = vmatpush1.msra.mxu0 0.0
  %1096 = vmatprep.subr.mxu0 0.0
  %1097 = vmatpush1.msra.mxu0 0.0
  %1098 = vmatprep.subr.mxu0 0.0
  %1099 = vmatpush1.msra.mxu0 0.0
  %1100 = vmatprep.mubr.f32.mxu0 0.0
  %1101 = vmatmul.mubr.f32.gmra.mrb[0].mxu0 %v1034
  %v1102 = vpop.f32.mrb[0].mxu0
  %v1103 = vadd.f32 %v204, %v1102
  %v1104 = vpop.f32.mrb[0].mxu0
  %1105 = vdwg.mxu0
  %v1106 = vxor.u32 %v1103, 2147483648
  %v1107 = vmul.f32 %v1106, 1.442695
  %v1108 = vpow.pop %v1107
  %v1109 = vadd.f32 %v1108, 1.0
  %v1110 = vrcp.pop %v1109
  %v1111 = vmul.f32 1.0, %v1110
  %1113 = vrot.lane.b32.xlu0 %v1103, 32
  %v1114 = vpop.permute.xlu0 %1113
  %v1116 = vmul.f32 %v1111, %v1114
  %1118 = vrot.lane.b32.xlu0 %v1116, 64
  %v1119 = vpop.permute.xlu0 %1118
  %v1121 = vadd.f32 %v1103, %v1119
  %v1122 = vtanh.pop %v1121
  %v1123 = vsub.f32 1.0, %v1111
  %1125 = vrot.lane.b32.xlu0 %v1122, 96
  %v1126 = vpop.permute.xlu0 %1125
  %v1128 = vmul.f32 %v1123, %v1126
  %v1129 = vmul.f32 %v1111, %v929
  %v1130 = vadd.f32 %v1128, %v1129
  %v1131 = vsel %vm232, %v1030, 0
  %1133 = vmatprep.subr.mxu0 0.0
  %1134 = vmatpush1.msra.mxu0 %v38
  %1135 = vmatprep.subr.mxu0 0.0
  %1136 = vmatpush1.msra.mxu0 %v39
  %1137 = vmatprep.subr.mxu0 0.0
  %1138 = vmatpush1.msra.mxu0 %v40
  %1139 = vmatprep.subr.mxu0 0.0
  %1140 = vmatpush1.msra.mxu0 %v41
  %1141 = vmatprep.subr.mxu0 0.0
  %1142 = vmatpush1.msra.mxu0 0.0
  %1143 = vmatprep.subr.mxu0 0.0
  %1144 = vmatpush1.msra.mxu0 0.0
  %1145 = vmatprep.subr.mxu0 0.0
  %1146 = vmatpush1.msra.mxu0 0.0
  %1147 = vmatprep.subr.mxu0 0.0
  %1148 = vmatpush1.msra.mxu0 0.0
  %1149 = vmatprep.subr.mxu0 0.0
  %1150 = vmatpush1.msra.mxu0 0.0
  %1151 = vmatprep.subr.mxu0 0.0
  %1152 = vmatpush1.msra.mxu0 0.0
  %1153 = vmatprep.subr.mxu0 0.0
  %1154 = vmatpush1.msra.mxu0 0.0
  %1155 = vmatprep.subr.mxu0 0.0
  %1156 = vmatpush1.msra.mxu0 0.0
  %1157 = vmatprep.subr.mxu0 0.0
  %1158 = vmatpush1.msra.mxu0 0.0
  %1159 = vmatprep.subr.mxu0 0.0
  %1160 = vmatpush1.msra.mxu0 0.0
  %1161 = vmatprep.subr.mxu0 0.0
  %1162 = vmatpush1.msra.mxu0 0.0
  %1163 = vmatprep.subr.mxu0 0.0
  %1164 = vmatpush1.msra.mxu0 0.0
  %1165 = vmatprep.subr.mxu0 0.0
  %1166 = vmatpush1.msra.mxu0 0.0
  %1167 = vmatprep.subr.mxu0 0.0
  %1168 = vmatpush1.msra.mxu0 0.0
  %1169 = vmatprep.subr.mxu0 0.0
  %1170 = vmatpush1.msra.mxu0 0.0
  %1171 = vmatprep.subr.mxu0 0.0
  %1172 = vmatpush1.msra.mxu0 0.0
  %1173 = vmatprep.subr.mxu0 0.0
  %1174 = vmatpush1.msra.mxu0 0.0
  %1175 = vmatprep.subr.mxu0 0.0
  %1176 = vmatpush1.msra.mxu0 0.0
  %1177 = vmatprep.subr.mxu0 0.0
  %1178 = vmatpush1.msra.mxu0 0.0
  %1179 = vmatprep.subr.mxu0 0.0
  %1180 = vmatpush1.msra.mxu0 0.0
  %1181 = vmatprep.subr.mxu0 0.0
  %1182 = vmatpush1.msra.mxu0 0.0
  %1183 = vmatprep.subr.mxu0 0.0
  %1184 = vmatpush1.msra.mxu0 0.0
  %1185 = vmatprep.subr.mxu0 0.0
  %1186 = vmatpush1.msra.mxu0 0.0
  %1187 = vmatprep.subr.mxu0 0.0
  %1188 = vmatpush1.msra.mxu0 0.0
  %1189 = vmatprep.subr.mxu0 0.0
  %1190 = vmatpush1.msra.mxu0 0.0
  %1191 = vmatprep.subr.mxu0 0.0
  %1192 = vmatpush1.msra.mxu0 0.0
  %1193 = vmatprep.subr.mxu0 0.0
  %1194 = vmatpush1.msra.mxu0 0.0
  %1195 = vmatprep.subr.mxu0 0.0
  %1196 = vmatpush1.msra.mxu0 0.0
  %1197 = vmatprep.mubr.f32.mxu0 0.0
  %1198 = vmatmul.mubr.f32.gmra.mrb[0].mxu0 %v1131
  %v1199 = vpop.f32.mrb[0].mxu0
  %v1200 = vadd.f32 0.0, %v1199
  %v1201 = vpop.f32.mrb[0].mxu0
  %1202 = vdwg.mxu0
  %v1203 = vadd.f32 %v178, %v1200
  %v1204 = vxor.u32 %v1203, 2147483648
  %v1205 = vmul.f32 %v1204, 1.442695
  %v1206 = vpow.pop %v1205
  %v1207 = vadd.f32 %v1206, 1.0
  %v1208 = vrcp.pop %v1207
  %v1209 = vmul.f32 1.0, %v1208
  %1211 = vrot.lane.b32.xlu0 %v1203, 32
  %v1212 = vpop.permute.xlu0 %1211
  %v1214 = vmul.f32 %v1209, %v1212
  %1216 = vrot.lane.b32.xlu0 %v1214, 64
  %v1217 = vpop.permute.xlu0 %1216
  %v1219 = vadd.f32 %v1203, %v1217
  %v1220 = vtanh.pop %v1219
  %v1221 = vsub.f32 1.0, %v1209
  %1223 = vrot.lane.b32.xlu0 %v1220, 96
  %v1224 = vpop.permute.xlu0 %1223
  %v1226 = vmul.f32 %v1221, %v1224
  %v1227 = vmul.f32 %v1209, %v1027
  %v1228 = vadd.f32 %v1226, %v1227
  %1230 = vrot.lane.b32.xlu0 %v1228, 96
  %v1231 = vpop.permute.xlu0 %1230
  %v1233 = vsel %vm232, %v1231, %v1130
  %v1235 = vsel %vm429, %v1233, 0
  %1237 = vmatprep.subr.mxu0 0.0
  %1238 = vmatpush1.msra.mxu0 %v191
  %1239 = vmatprep.subr.mxu0 0.0
  %1240 = vmatpush1.msra.mxu0 %v192
  %1241 = vmatprep.subr.mxu0 0.0
  %1242 = vmatpush1.msra.mxu0 %v193
  %1243 = vmatprep.subr.mxu0 0.0
  %1244 = vmatpush1.msra.mxu0 %v194
  %1245 = vmatprep.subr.mxu0 0.0
  %1246 = vmatpush1.msra.mxu0 %v195
  %1247 = vmatprep.subr.mxu0 0.0
  %1248 = vmatpush1.msra.mxu0 %v196
  %1249 = vmatprep.subr.mxu0 0.0
  %1250 = vmatpush1.msra.mxu0 %v197
  %1251 = vmatprep.subr.mxu0 0.0
  %1252 = vmatpush1.msra.mxu0 %v198
  %1253 = vmatprep.subr.mxu0 0.0
  %1254 = vmatpush1.msra.mxu0 0.0
  %1255 = vmatprep.subr.mxu0 0.0
  %1256 = vmatpush1.msra.mxu0 0.0
  %1257 = vmatprep.subr.mxu0 0.0
  %1258 = vmatpush1.msra.mxu0 0.0
  %1259 = vmatprep.subr.mxu0 0.0
  %1260 = vmatpush1.msra.mxu0 0.0
  %1261 = vmatprep.subr.mxu0 0.0
  %1262 = vmatpush1.msra.mxu0 0.0
  %1263 = vmatprep.subr.mxu0 0.0
  %1264 = vmatpush1.msra.mxu0 0.0
  %1265 = vmatprep.subr.mxu0 0.0
  %1266 = vmatpush1.msra.mxu0 0.0
  %1267 = vmatprep.subr.mxu0 0.0
  %1268 = vmatpush1.msra.mxu0 0.0
  %1269 = vmatprep.subr.mxu0 0.0
  %1270 = vmatpush1.msra.mxu0 0.0
  %1271 = vmatprep.subr.mxu0 0.0
  %1272 = vmatpush1.msra.mxu0 0.0
  %1273 = vmatprep.subr.mxu0 0.0
  %1274 = vmatpush1.msra.mxu0 0.0
  %1275 = vmatprep.subr.mxu0 0.0
  %1276 = vmatpush1.msra.mxu0 0.0
  %1277 = vmatprep.subr.mxu0 0.0
  %1278 = vmatpush1.msra.mxu0 0.0
  %1279 = vmatprep.subr.mxu0 0.0
  %1280 = vmatpush1.msra.mxu0 0.0
  %1281 = vmatprep.subr.mxu0 0.0
  %1282 = vmatpush1.msra.mxu0 0.0
  %1283 = vmatprep.subr.mxu0 0.0
  %1284 = vmatpush1.msra.mxu0 0.0
  %1285 = vmatprep.subr.mxu0 0.0
  %1286 = vmatpush1.msra.mxu0 0.0
  %1287 = vmatprep.subr.mxu0 0.0
  %1288 = vmatpush1.msra.mxu0 0.0
  %1289 = vmatprep.subr.mxu0 0.0
  %1290 = vmatpush1.msra.mxu0 0.0
  %1291 = vmatprep.subr.mxu0 0.0
  %1292 = vmatpush1.msra.mxu0 0.0
  %1293 = vmatprep.subr.mxu0 0.0
  %1294 = vmatpush1.msra.mxu0 0.0
  %1295 = vmatprep.subr.mxu0 0.0
  %1296 = vmatpush1.msra.mxu0 0.0
  %1297 = vmatprep.subr.mxu0 0.0
  %1298 = vmatpush1.msra.mxu0 0.0
  %1299 = vmatprep.subr.mxu0 0.0
  %1300 = vmatpush1.msra.mxu0 0.0
  %1301 = vmatprep.mubr.f32.mxu0 0.0
  %1302 = vmatmul.mubr.f32.gmra.mrb[0].mxu0 %v1235
  %v1303 = vpop.f32.mrb[0].mxu0
  %v1304 = vadd.f32 %v204, %v1303
  %v1305 = vpop.f32.mrb[0].mxu0
  %1306 = vdwg.mxu0
  %v1307 = vxor.u32 %v1304, 2147483648
  %v1308 = vmul.f32 %v1307, 1.442695
  %v1309 = vpow.pop %v1308
  %v1310 = vadd.f32 %v1309, 1.0
  %v1311 = vrcp.pop %v1310
  %v1312 = vmul.f32 1.0, %v1311
  %1314 = vrot.lane.b32.xlu0 %v1304, 32
  %v1315 = vpop.permute.xlu0 %1314
  %v1317 = vmul.f32 %v1312, %v1315
  %1319 = vrot.lane.b32.xlu0 %v1317, 64
  %v1320 = vpop.permute.xlu0 %1319
  %v1322 = vadd.f32 %v1304, %v1320
  %v1323 = vtanh.pop %v1322
  %v1324 = vsub.f32 1.0, %v1312
  %1326 = vrot.lane.b32.xlu0 %v1323, 96
  %v1327 = vpop.permute.xlu0 %1326
  %v1329 = vmul.f32 %v1324, %v1327
  %v1330 = vmul.f32 %v1312, %v1130
  %v1331 = vadd.f32 %v1329, %v1330
  %v1332 = vsel %vm232, %v1231, 0
  %1334 = vmatprep.subr.mxu0 0.0
  %1335 = vmatpush1.msra.mxu0 %v38
  %1336 = vmatprep.subr.mxu0 0.0
  %1337 = vmatpush1.msra.mxu0 %v39
  %1338 = vmatprep.subr.mxu0 0.0
  %1339 = vmatpush1.msra.mxu0 %v40
  %1340 = vmatprep.subr.mxu0 0.0
  %1341 = vmatpush1.msra.mxu0 %v41
  %1342 = vmatprep.subr.mxu0 0.0
  %1343 = vmatpush1.msra.mxu0 0.0
  %1344 = vmatprep.subr.mxu0 0.0
  %1345 = vmatpush1.msra.mxu0 0.0
  %1346 = vmatprep.subr.mxu0 0.0
  %1347 = vmatpush1.msra.mxu0 0.0
  %1348 = vmatprep.subr.mxu0 0.0
  %1349 = vmatpush1.msra.mxu0 0.0
  %1350 = vmatprep.subr.mxu0 0.0
  %1351 = vmatpush1.msra.mxu0 0.0
  %1352 = vmatprep.subr.mxu0 0.0
  %1353 = vmatpush1.msra.mxu0 0.0
  %1354 = vmatprep.subr.mxu0 0.0
  %1355 = vmatpush1.msra.mxu0 0.0
  %1356 = vmatprep.subr.mxu0 0.0
  %1357 = vmatpush1.msra.mxu0 0.0
  %1358 = vmatprep.subr.mxu0 0.0
  %1359 = vmatpush1.msra.mxu0 0.0
  %1360 = vmatprep.subr.mxu0 0.0
  %1361 = vmatpush1.msra.mxu0 0.0
  %1362 = vmatprep.subr.mxu0 0.0
  %1363 = vmatpush1.msra.mxu0 0.0
  %1364 = vmatprep.subr.mxu0 0.0
  %1365 = vmatpush1.msra.mxu0 0.0
  %1366 = vmatprep.subr.mxu0 0.0
  %1367 = vmatpush1.msra.mxu0 0.0
  %1368 = vmatprep.subr.mxu0 0.0
  %1369 = vmatpush1.msra.mxu0 0.0
  %1370 = vmatprep.subr.mxu0 0.0
  %1371 = vmatpush1.msra.mxu0 0.0
  %1372 = vmatprep.subr.mxu0 0.0
  %1373 = vmatpush1.msra.mxu0 0.0
  %1374 = vmatprep.subr.mxu0 0.0
  %1375 = vmatpush1.msra.mxu0 0.0
  %1376 = vmatprep.subr.mxu0 0.0
  %1377 = vmatpush1.msra.mxu0 0.0
  %1378 = vmatprep.subr.mxu0 0.0
  %1379 = vmatpush1.msra.mxu0 0.0
  %1380 = vmatprep.subr.mxu0 0.0
  %1381 = vmatpush1.msra.mxu0 0.0
  %1382 = vmatprep.subr.mxu0 0.0
  %1383 = vmatpush1.msra.mxu0 0.0
  %1384 = vmatprep.subr.mxu0 0.0
  %1385 = vmatpush1.msra.mxu0 0.0
  %1386 = vmatprep.subr.mxu0 0.0
  %1387 = vmatpush1.msra.mxu0 0.0
  %1388 = vmatprep.subr.mxu0 0.0
  %1389 = vmatpush1.msra.mxu0 0.0
  %1390 = vmatprep.subr.mxu0 0.0
  %1391 = vmatpush1.msra.mxu0 0.0
  %1392 = vmatprep.subr.mxu0 0.0
  %1393 = vmatpush1.msra.mxu0 0.0
  %1394 = vmatprep.subr.mxu0 0.0
  %1395 = vmatpush1.msra.mxu0 0.0
  %1396 = vmatprep.subr.mxu0 0.0
  %1397 = vmatpush1.msra.mxu0 0.0
  %1398 = vmatprep.mubr.f32.mxu0 0.0
  %1399 = vmatmul.mubr.f32.gmra.mrb[0].mxu0 %v1332
  %v1400 = vpop.f32.mrb[0].mxu0
  %v1401 = vadd.f32 0.0, %v1400
  %v1402 = vpop.f32.mrb[0].mxu0
  %1403 = vdwg.mxu0
  %v1404 = vadd.f32 %v183, %v1401
  %v1405 = vxor.u32 %v1404, 2147483648
  %v1406 = vmul.f32 %v1405, 1.442695
  %v1407 = vpow.pop %v1406
  %v1408 = vadd.f32 %v1407, 1.0
  %v1409 = vrcp.pop %v1408
  %v1410 = vmul.f32 1.0, %v1409
  %1412 = vrot.lane.b32.xlu0 %v1404, 32
  %v1413 = vpop.permute.xlu0 %1412
  %v1415 = vmul.f32 %v1410, %v1413
  %1417 = vrot.lane.b32.xlu0 %v1415, 64
  %v1418 = vpop.permute.xlu0 %1417
  %v1420 = vadd.f32 %v1404, %v1418
  %v1421 = vtanh.pop %v1420
  %v1422 = vsub.f32 1.0, %v1410
  %1424 = vrot.lane.b32.xlu0 %v1421, 96
  %v1425 = vpop.permute.xlu0 %1424
  %v1427 = vmul.f32 %v1422, %v1425
  %v1428 = vmul.f32 %v1410, %v1228
  %v1429 = vadd.f32 %v1427, %v1428
  %1431 = vrot.lane.b32.xlu0 %v1429, 96
  %v1432 = vpop.permute.xlu0 %1431
  %v1434 = vsel %vm232, %v1432, %v1331
  %v1436 = vsel %vm429, %v1434, 0
  %1438 = vmatprep.subr.mxu0 0.0
  %1439 = vmatpush1.msra.mxu0 %v191
  %1440 = vmatprep.subr.mxu0 0.0
  %1441 = vmatpush1.msra.mxu0 %v192
  %1442 = vmatprep.subr.mxu0 0.0
  %1443 = vmatpush1.msra.mxu0 %v193
  %1444 = vmatprep.subr.mxu0 0.0
  %1445 = vmatpush1.msra.mxu0 %v194
  %1446 = vmatprep.subr.mxu0 0.0
  %1447 = vmatpush1.msra.mxu0 %v195
  %1448 = vmatprep.subr.mxu0 0.0
  %1449 = vmatpush1.msra.mxu0 %v196
  %1450 = vmatprep.subr.mxu0 0.0
  %1451 = vmatpush1.msra.mxu0 %v197
  %1452 = vmatprep.subr.mxu0 0.0
  %1453 = vmatpush1.msra.mxu0 %v198
  %1454 = vmatprep.subr.mxu0 0.0
  %1455 = vmatpush1.msra.mxu0 0.0
  %1456 = vmatprep.subr.mxu0 0.0
  %1457 = vmatpush1.msra.mxu0 0.0
  %1458 = vmatprep.subr.mxu0 0.0
  %1459 = vmatpush1.msra.mxu0 0.0
  %1460 = vmatprep.subr.mxu0 0.0
  %1461 = vmatpush1.msra.mxu0 0.0
  %1462 = vmatprep.subr.mxu0 0.0
  %1463 = vmatpush1.msra.mxu0 0.0
  %1464 = vmatprep.subr.mxu0 0.0
  %1465 = vmatpush1.msra.mxu0 0.0
  %1466 = vmatprep.subr.mxu0 0.0
  %1467 = vmatpush1.msra.mxu0 0.0
  %1468 = vmatprep.subr.mxu0 0.0
  %1469 = vmatpush1.msra.mxu0 0.0
  %1470 = vmatprep.subr.mxu0 0.0
  %1471 = vmatpush1.msra.mxu0 0.0
  %1472 = vmatprep.subr.mxu0 0.0
  %1473 = vmatpush1.msra.mxu0 0.0
  %1474 = vmatprep.subr.mxu0 0.0
  %1475 = vmatpush1.msra.mxu0 0.0
  %1476 = vmatprep.subr.mxu0 0.0
  %1477 = vmatpush1.msra.mxu0 0.0
  %1478 = vmatprep.subr.mxu0 0.0
  %1479 = vmatpush1.msra.mxu0 0.0
  %1480 = vmatprep.subr.mxu0 0.0
  %1481 = vmatpush1.msra.mxu0 0.0
  %1482 = vmatprep.subr.mxu0 0.0
  %1483 = vmatpush1.msra.mxu0 0.0
  %1484 = vmatprep.subr.mxu0 0.0
  %1485 = vmatpush1.msra.mxu0 0.0
  %1486 = vmatprep.subr.mxu0 0.0
  %1487 = vmatpush1.msra.mxu0 0.0
  %1488 = vmatprep.subr.mxu0 0.0
  %1489 = vmatpush1.msra.mxu0 0.0
  %1490 = vmatprep.subr.mxu0 0.0
  %1491 = vmatpush1.msra.mxu0 0.0
  %1492 = vmatprep.subr.mxu0 0.0
  %1493 = vmatpush1.msra.mxu0 0.0
  %1494 = vmatprep.subr.mxu0 0.0
  %1495 = vmatpush1.msra.mxu0 0.0
  %1496 = vmatprep.subr.mxu0 0.0
  %1497 = vmatpush1.msra.mxu0 0.0
  %1498 = vmatprep.subr.mxu0 0.0
  %1499 = vmatpush1.msra.mxu0 0.0
  %1500 = vmatprep.subr.mxu0 0.0
  %1501 = vmatpush1.msra.mxu0 0.0
  %1502 = vmatprep.mubr.f32.mxu0 0.0
  %1503 = vmatmul.mubr.f32.gmra.mrb[0].mxu0 %v1436
  %v1504 = vpop.f32.mrb[0].mxu0
  %v1505 = vadd.f32 %v204, %v1504
  %v1506 = vpop.f32.mrb[0].mxu0
  %1507 = vdwg.mxu0
  %v1508 = vxor.u32 %v1505, 2147483648
  %v1509 = vmul.f32 %v1508, 1.442695
  %v1510 = vpow.pop %v1509
  %v1511 = vadd.f32 %v1510, 1.0
  %v1512 = vrcp.pop %v1511
  %v1513 = vmul.f32 1.0, %v1512
  %1515 = vrot.lane.b32.xlu0 %v1505, 32
  %v1516 = vpop.permute.xlu0 %1515
  %v1518 = vmul.f32 %v1513, %v1516
  %1520 = vrot.lane.b32.xlu0 %v1518, 64
  %v1521 = vpop.permute.xlu0 %1520
  %v1523 = vadd.f32 %v1505, %v1521
  %v1524 = vtanh.pop %v1523
  %v1525 = vsub.f32 1.0, %v1513
  %1527 = vrot.lane.b32.xlu0 %v1524, 96
  %v1528 = vpop.permute.xlu0 %1527
  %v1530 = vmul.f32 %v1525, %v1528
  %v1531 = vmul.f32 %v1513, %v1331
  %v1532 = vadd.f32 %v1530, %v1531
  %v1533 = vsel %vm232, %v1432, 0
  %1535 = vmatprep.subr.mxu0 0.0
  %1536 = vmatpush1.msra.mxu0 %v38
  %1537 = vmatprep.subr.mxu0 0.0
  %1538 = vmatpush1.msra.mxu0 %v39
  %1539 = vmatprep.subr.mxu0 0.0
  %1540 = vmatpush1.msra.mxu0 %v40
  %1541 = vmatprep.subr.mxu0 0.0
  %1542 = vmatpush1.msra.mxu0 %v41
  %1543 = vmatprep.subr.mxu0 0.0
  %1544 = vmatpush1.msra.mxu0 0.0
  %1545 = vmatprep.subr.mxu0 0.0
  %1546 = vmatpush1.msra.mxu0 0.0
  %1547 = vmatprep.subr.mxu0 0.0
  %1548 = vmatpush1.msra.mxu0 0.0
  %1549 = vmatprep.subr.mxu0 0.0
  %1550 = vmatpush1.msra.mxu0 0.0
  %1551 = vmatprep.subr.mxu0 0.0
  %1552 = vmatpush1.msra.mxu0 0.0
  %1553 = vmatprep.subr.mxu0 0.0
  %1554 = vmatpush1.msra.mxu0 0.0
  %1555 = vmatprep.subr.mxu0 0.0
  %1556 = vmatpush1.msra.mxu0 0.0
  %1557 = vmatprep.subr.mxu0 0.0
  %1558 = vmatpush1.msra.mxu0 0.0
  %1559 = vmatprep.subr.mxu0 0.0
  %1560 = vmatpush1.msra.mxu0 0.0
  %1561 = vmatprep.subr.mxu0 0.0
  %1562 = vmatpush1.msra.mxu0 0.0
  %1563 = vmatprep.subr.mxu0 0.0
  %1564 = vmatpush1.msra.mxu0 0.0
  %1565 = vmatprep.subr.mxu0 0.0
  %1566 = vmatpush1.msra.mxu0 0.0
  %1567 = vmatprep.subr.mxu0 0.0
  %1568 = vmatpush1.msra.mxu0 0.0
  %1569 = vmatprep.subr.mxu0 0.0
  %1570 = vmatpush1.msra.mxu0 0.0
  %1571 = vmatprep.subr.mxu0 0.0
  %1572 = vmatpush1.msra.mxu0 0.0
  %1573 = vmatprep.subr.mxu0 0.0
  %1574 = vmatpush1.msra.mxu0 0.0
  %1575 = vmatprep.subr.mxu0 0.0
  %1576 = vmatpush1.msra.mxu0 0.0
  %1577 = vmatprep.subr.mxu0 0.0
  %1578 = vmatpush1.msra.mxu0 0.0
  %1579 = vmatprep.subr.mxu0 0.0
  %1580 = vmatpush1.msra.mxu0 0.0
  %1581 = vmatprep.subr.mxu0 0.0
  %1582 = vmatpush1.msra.mxu0 0.0
  %1583 = vmatprep.subr.mxu0 0.0
  %1584 = vmatpush1.msra.mxu0 0.0
  %1585 = vmatprep.subr.mxu0 0.0
  %1586 = vmatpush1.msra.mxu0 0.0
  %1587 = vmatprep.subr.mxu0 0.0
  %1588 = vmatpush1.msra.mxu0 0.0
  %1589 = vmatprep.subr.mxu0 0.0
  %1590 = vmatpush1.msra.mxu0 0.0
  %1591 = vmatprep.subr.mxu0 0.0
  %1592 = vmatpush1.msra.mxu0 0.0
  %1593 = vmatprep.subr.mxu0 0.0
  %1594 = vmatpush1.msra.mxu0 0.0
  %1595 = vmatprep.subr.mxu0 0.0
  %1596 = vmatpush1.msra.mxu0 0.0
  %1597 = vmatprep.subr.mxu0 0.0
  %1598 = vmatpush1.msra.mxu0 0.0
  %1599 = vmatprep.mubr.f32.mxu0 0.0
  %1600 = vmatmul.mubr.f32.gmra.mrb[0].mxu0 %v1533
  %v1601 = vpop.f32.mrb[0].mxu0
  %v1602 = vadd.f32 0.0, %v1601
  %v1603 = vpop.f32.mrb[0].mxu0
  %1604 = vdwg.mxu0
  %v1605 = vadd.f32 %v188, %v1602
  %v1606 = vxor.u32 %v1605, 2147483648
  %v1607 = vmul.f32 %v1606, 1.442695
  %v1608 = vpow.pop %v1607
  %v1609 = vadd.f32 %v1608, 1.0
  %v1610 = vrcp.pop %v1609
  %v1611 = vmul.f32 1.0, %v1610
  %1613 = vrot.lane.b32.xlu0 %v1605, 32
  %v1614 = vpop.permute.xlu0 %1613
  %v1616 = vmul.f32 %v1611, %v1614
  %1618 = vrot.lane.b32.xlu0 %v1616, 64
  %v1619 = vpop.permute.xlu0 %1618
  %v1621 = vadd.f32 %v1605, %v1619
  %v1622 = vtanh.pop %v1621
  %v1623 = vsub.f32 1.0, %v1611
  %1625 = vrot.lane.b32.xlu0 %v1622, 96
  %v1626 = vpop.permute.xlu0 %1625
  %v1628 = vmul.f32 %v1623, %v1626
  %v1629 = vmul.f32 %v1611, %v1429
  %v1630 = vadd.f32 %v1628, %v1629
  %1632 = vrot.lane.b32.xlu0 %v1630, 96
  %v1633 = vpop.permute.xlu0 %1632
  %v1635 = vsel %vm232, %v1633, %v1532
  %v1637 = vsel %vm429, %v1635, 0
  %1639 = vmatprep.subr.mxu0 0.0
  %1640 = vmatpush1.msra.mxu0 %v191
  %1641 = vmatprep.subr.mxu0 0.0
  %1642 = vmatpush1.msra.mxu0 %v192
  %1643 = vmatprep.subr.mxu0 0.0
  %1644 = vmatpush1.msra.mxu0 %v193
  %1645 = vmatprep.subr.mxu0 0.0
  %1646 = vmatpush1.msra.mxu0 %v194
  %1647 = vmatprep.subr.mxu0 0.0
  %1648 = vmatpush1.msra.mxu0 %v195
  %1649 = vmatprep.subr.mxu0 0.0
  %1650 = vmatpush1.msra.mxu0 %v196
  %1651 = vmatprep.subr.mxu0 0.0
  %1652 = vmatpush1.msra.mxu0 %v197
  %1653 = vmatprep.subr.mxu0 0.0
  %1654 = vmatpush1.msra.mxu0 %v198
  %1655 = vmatprep.subr.mxu0 0.0
  %1656 = vmatpush1.msra.mxu0 0.0
  %1657 = vmatprep.subr.mxu0 0.0
  %1658 = vmatpush1.msra.mxu0 0.0
  %1659 = vmatprep.subr.mxu0 0.0
  %1660 = vmatpush1.msra.mxu0 0.0
  %1661 = vmatprep.subr.mxu0 0.0
  %1662 = vmatpush1.msra.mxu0 0.0
  %1663 = vmatprep.subr.mxu0 0.0
  %1664 = vmatpush1.msra.mxu0 0.0
  %1665 = vmatprep.subr.mxu0 0.0
  %1666 = vmatpush1.msra.mxu0 0.0
  %1667 = vmatprep.subr.mxu0 0.0
  %1668 = vmatpush1.msra.mxu0 0.0
  %1669 = vmatprep.subr.mxu0 0.0
  %1670 = vmatpush1.msra.mxu0 0.0
  %1671 = vmatprep.subr.mxu0 0.0
  %1672 = vmatpush1.msra.mxu0 0.0
  %1673 = vmatprep.subr.mxu0 0.0
  %1674 = vmatpush1.msra.mxu0 0.0
  %1675 = vmatprep.subr.mxu0 0.0
  %1676 = vmatpush1.msra.mxu0 0.0
  %1677 = vmatprep.subr.mxu0 0.0
  %1678 = vmatpush1.msra.mxu0 0.0
  %1679 = vmatprep.subr.mxu0 0.0
  %1680 = vmatpush1.msra.mxu0 0.0
  %1681 = vmatprep.subr.mxu0 0.0
  %1682 = vmatpush1.msra.mxu0 0.0
  %1683 = vmatprep.subr.mxu0 0.0
  %1684 = vmatpush1.msra.mxu0 0.0
  %1685 = vmatprep.subr.mxu0 0.0
  %1686 = vmatpush1.msra.mxu0 0.0
  %1687 = vmatprep.subr.mxu0 0.0
  %1688 = vmatpush1.msra.mxu0 0.0
  %1689 = vmatprep.subr.mxu0 0.0
  %1690 = vmatpush1.msra.mxu0 0.0
  %1691 = vmatprep.subr.mxu0 0.0
  %1692 = vmatpush1.msra.mxu0 0.0
  %1693 = vmatprep.subr.mxu0 0.0
  %1694 = vmatpush1.msra.mxu0 0.0
  %1695 = vmatprep.subr.mxu0 0.0
  %1696 = vmatpush1.msra.mxu0 0.0
  %1697 = vmatprep.subr.mxu0 0.0
  %1698 = vmatpush1.msra.mxu0 0.0
  %1699 = vmatprep.subr.mxu0 0.0
  %1700 = vmatpush1.msra.mxu0 0.0
  %1701 = vmatprep.subr.mxu0 0.0
  %1702 = vmatpush1.msra.mxu0 0.0
  %1703 = vmatprep.mubr.f32.mxu0 0.0
  %1704 = vmatmul.mubr.f32.gmra.mrb[0].mxu0 %v1637
  %v1705 = vpop.f32.mrb[0].mxu0
  %v1706 = vadd.f32 %v204, %v1705
  %v1707 = vpop.f32.mrb[0].mxu0
  %1708 = vdwg.mxu0
  %v1709 = vxor.u32 %v1706, 2147483648
  %v1710 = vmul.f32 %v1709, 1.442695
  %v1711 = vpow.pop %v1710
  %v1712 = vadd.f32 %v1711, 1.0
  %v1713 = vrcp.pop %v1712
  %v1714 = vmul.f32 1.0, %v1713
  %1716 = vrot.lane.b32.xlu0 %v1706, 32
  %v1717 = vpop.permute.xlu0 %1716
  %v1719 = vmul.f32 %v1714, %v1717
  %1721 = vrot.lane.b32.xlu0 %v1719, 64
  %v1722 = vpop.permute.xlu0 %1721
  %v1724 = vadd.f32 %v1706, %v1722
  %v1725 = vtanh.pop %v1724
  %v1726 = vsub.f32 1.0, %v1714
  %1728 = vrot.lane.b32.xlu0 %v1725, 96
  %v1729 = vpop.permute.xlu0 %1728
  %v1731 = vmul.f32 %v1726, %v1729
  %v1732 = vmul.f32 %v1714, %v1532
  %v1733 = vadd.f32 %v1731, %v1732
  %v1734 = vld [vmem:[%s6] sm:$0xff]
  %v1735 = vld [vmem:[%s6 + $0x8] sm:$0xff]
  %v1736 = vld [vmem:[%s6 + $0x10] sm:$0xff]
  %v1737 = vld [vmem:[%s6 + $0x18] sm:$0xff]
  %v1738 = vld [vmem:[%s7] sm:$0x1]
  %v1740 = vlaneseq
  %v1741 = vshrl.u32 %v1740, 7
  %v1742 = vsub.s32 0, %v1741
  %v1743 = vrot.slane %v1738, %v1742
  %1746 = vrot.lane.b32.xlu0 %v1733, 96
  %v1747 = vpop.permute.xlu0 %1746
  %v1748 = vsel %vm232, %v1747, 0
  %1750 = vmatprep.subr.mxu0 0.0
  %1751 = vmatpush1.msra.mxu0 %v1734
  %1752 = vmatprep.subr.mxu0 0.0
  %1753 = vmatpush1.msra.mxu0 %v1735
  %1754 = vmatprep.subr.mxu0 0.0
  %1755 = vmatpush1.msra.mxu0 %v1736
  %1756 = vmatprep.subr.mxu0 0.0
  %1757 = vmatpush1.msra.mxu0 %v1737
  %1758 = vmatprep.subr.mxu0 0.0
  %1759 = vmatpush1.msra.mxu0 0.0
  %1760 = vmatprep.subr.mxu0 0.0
  %1761 = vmatpush1.msra.mxu0 0.0
  %1762 = vmatprep.subr.mxu0 0.0
  %1763 = vmatpush1.msra.mxu0 0.0
  %1764 = vmatprep.subr.mxu0 0.0
  %1765 = vmatpush1.msra.mxu0 0.0
  %1766 = vmatprep.subr.mxu0 0.0
  %1767 = vmatpush1.msra.mxu0 0.0
  %1768 = vmatprep.subr.mxu0 0.0
  %1769 = vmatpush1.msra.mxu0 0.0
  %1770 = vmatprep.subr.mxu0 0.0
  %1771 = vmatpush1.msra.mxu0 0.0
  %1772 = vmatprep.subr.mxu0 0.0
  %1773 = vmatpush1.msra.mxu0 0.0
  %1774 = vmatprep.subr.mxu0 0.0
  %1775 = vmatpush1.msra.mxu0 0.0
  %1776 = vmatprep.subr.mxu0 0.0
  %1777 = vmatpush1.msra.mxu0 0.0
  %1778 = vmatprep.subr.mxu0 0.0
  %1779 = vmatpush1.msra.mxu0 0.0
  %1780 = vmatprep.subr.mxu0 0.0
  %1781 = vmatpush1.msra.mxu0 0.0
  %1782 = vmatprep.subr.mxu0 0.0
  %1783 = vmatpush1.msra.mxu0 0.0
  %1784 = vmatprep.subr.mxu0 0.0
  %1785 = vmatpush1.msra.mxu0 0.0
  %1786 = vmatprep.subr.mxu0 0.0
  %1787 = vmatpush1.msra.mxu0 0.0
  %1788 = vmatprep.subr.mxu0 0.0
  %1789 = vmatpush1.msra.mxu0 0.0
  %1790 = vmatprep.subr.mxu0 0.0
  %1791 = vmatpush1.msra.mxu0 0.0
  %1792 = vmatprep.subr.mxu0 0.0
  %1793 = vmatpush1.msra.mxu0 0.0
  %1794 = vmatprep.subr.mxu0 0.0
  %1795 = vmatpush1.msra.mxu0 0.0
  %1796 = vmatprep.subr.mxu0 0.0
  %1797 = vmatpush1.msra.mxu0 0.0
  %1798 = vmatprep.subr.mxu0 0.0
  %1799 = vmatpush1.msra.mxu0 0.0
  %1800 = vmatprep.subr.mxu0 0.0
  %1801 = vmatpush1.msra.mxu0 0.0
  %1802 = vmatprep.subr.mxu0 0.0
  %1803 = vmatpush1.msra.mxu0 0.0
  %1804 = vmatprep.subr.mxu0 0.0
  %1805 = vmatpush1.msra.mxu0 0.0
  %1806 = vmatprep.subr.mxu0 0.0
  %1807 = vmatpush1.msra.mxu0 0.0
  %1808 = vmatprep.subr.mxu0 0.0
  %1809 = vmatpush1.msra.mxu0 0.0
  %1810 = vmatprep.subr.mxu0 0.0
  %1811 = vmatpush1.msra.mxu0 0.0
  %1812 = vmatprep.subr.mxu0 0.0
  %1813 = vmatpush1.msra.mxu0 0.0
  %1814 = vmatprep.mubr.f32.mxu0 0.0
  %1815 = vmatmul.mubr.f32.gmra.mrb[0].mxu0 %v1748
  %v1816 = vpop.f32.mrb[0].mxu0
  %v1817 = vadd.f32 %v1743, %v1816
  %v1818 = vpop.f32.mrb[0].mxu0
  %1819 = vdwg.mxu0
  %v1820 = vmax.f32 %v1817, 0.0
  %v1821 = vld [vmem:[%s8] sm:$0xff]
  %v1822 = vld [vmem:[%s8 + $0x8] sm:$0xff]
  %v1823 = vld [vmem:[#allocation2] sm:$0x1]
  %v1825 = vlaneseq
  %v1826 = vshrl.u32 %v1825, 7
  %v1827 = vsub.s32 0, %v1826
  %v1828 = vrot.slane %v1823, %v1827
  %vm1830 = vcmask 130048
  %v1832 = vsel %vm1830, %v1820, 0
  %1834 = vmatprep.subr.mxu0 0.0
  %1835 = vmatpush1.msra.mxu0 %v1821
  %1836 = vmatprep.subr.mxu0 0.0
  %1837 = vmatpush1.msra.mxu0 %v1822
  %1838 = vmatprep.subr.mxu0 0.0
  %1839 = vmatpush1.msra.mxu0 0.0
  %1840 = vmatprep.subr.mxu0 0.0
  %1841 = vmatpush1.msra.mxu0 0.0
  %1842 = vmatprep.subr.mxu0 0.0
  %1843 = vmatpush1.msra.mxu0 0.0
  %1844 = vmatprep.subr.mxu0 0.0
  %1845 = vmatpush1.msra.mxu0 0.0
  %1846 = vmatprep.subr.mxu0 0.0
  %1847 = vmatpush1.msra.mxu0 0.0
  %1848 = vmatprep.subr.mxu0 0.0
  %1849 = vmatpush1.msra.mxu0 0.0
  %1850 = vmatprep.subr.mxu0 0.0
  %1851 = vmatpush1.msra.mxu0 0.0
  %1852 = vmatprep.subr.mxu0 0.0
  %1853 = vmatpush1.msra.mxu0 0.0
  %1854 = vmatprep.subr.mxu0 0.0
  %1855 = vmatpush1.msra.mxu0 0.0
  %1856 = vmatprep.subr.mxu0 0.0
  %1857 = vmatpush1.msra.mxu0 0.0
  %1858 = vmatprep.subr.mxu0 0.0
  %1859 = vmatpush1.msra.mxu0 0.0
  %1860 = vmatprep.subr.mxu0 0.0
  %1861 = vmatpush1.msra.mxu0 0.0
  %1862 = vmatprep.subr.mxu0 0.0
  %1863 = vmatpush1.msra.mxu0 0.0
  %1864 = vmatprep.subr.mxu0 0.0
  %1865 = vmatpush1.msra.mxu0 0.0
  %1866 = vmatprep.subr.mxu0 0.0
  %1867 = vmatpush1.msra.mxu0 0.0
  %1868 = vmatprep.subr.mxu0 0.0
  %1869 = vmatpush1.msra.mxu0 0.0
  %1870 = vmatprep.subr.mxu0 0.0
  %1871 = vmatpush1.msra.mxu0 0.0
  %1872 = vmatprep.subr.mxu0 0.0
  %1873 = vmatpush1.msra.mxu0 0.0
  %1874 = vmatprep.subr.mxu0 0.0
  %1875 = vmatpush1.msra.mxu0 0.0
  %1876 = vmatprep.subr.mxu0 0.0
  %1877 = vmatpush1.msra.mxu0 0.0
  %1878 = vmatprep.subr.mxu0 0.0
  %1879 = vmatpush1.msra.mxu0 0.0
  %1880 = vmatprep.subr.mxu0 0.0
  %1881 = vmatpush1.msra.mxu0 0.0
  %1882 = vmatprep.subr.mxu0 0.0
  %1883 = vmatpush1.msra.mxu0 0.0
  %1884 = vmatprep.subr.mxu0 0.0
  %1885 = vmatpush1.msra.mxu0 0.0
  %1886 = vmatprep.subr.mxu0 0.0
  %1887 = vmatpush1.msra.mxu0 0.0
  %1888 = vmatprep.subr.mxu0 0.0
  %1889 = vmatpush1.msra.mxu0 0.0
  %1890 = vmatprep.subr.mxu0 0.0
  %1891 = vmatpush1.msra.mxu0 0.0
  %1892 = vmatprep.subr.mxu0 0.0
  %1893 = vmatpush1.msra.mxu0 0.0
  %1894 = vmatprep.subr.mxu0 0.0
  %1895 = vmatpush1.msra.mxu0 0.0
  %1896 = vmatprep.subr.mxu0 0.0
  %1897 = vmatpush1.msra.mxu0 0.0
  %1898 = vmatprep.mubr.f32.mxu0 0.0
  %1899 = vmatmul.mubr.f32.gmra.mrb[0].mxu0 %v1832
  %v1900 = vpop.f32.mrb[0].mxu0
  %v1901 = vadd.f32 %v1828, %v1900
  %v1902 = vpop.f32.mrb[0].mxu0
  %1903 = vdwg.mxu0
  %vm1904 = vcmask 7168
  %1905 = vst.msk [vmem:[%s10] sm:$0xff] %vm1904, %v1901
  // Predicated region
  $region42: #{earth_systems_rnn_forward.1} parent=0 // pred_check
    _
  $region43: #{earth_systems_rnn_forward.1} parent=0 // pred_check_branch
    %1907 = sbr.rel (0) target = $region45
  $region44: #{earth_systems_rnn_forward.1} parent=0 // pred_region
    _
  $region45: #{earth_systems_rnn_forward.1} parent=0 // pred_fallthru
    _
  // Predicated region
  $region46: #{earth_systems_rnn_forward.1} parent=0 // pred_check
    _
  $region47: #{earth_systems_rnn_forward.1} parent=0 // pred_check_branch
    %1909 = sbr.rel (0) target = $region49
  $region48: #{earth_systems_rnn_forward.1} parent=0 // pred_region
    _
  $region49: #{earth_systems_rnn_forward.1} parent=0 // pred_fallthru
    _

</llo_original>
